<compile_context>
chip_gen: v7x
topology: tpu7x:2x2x1
jax: 0.10.0
libtpu: 0.0.40
codegen_flags: <defaults>
</compile_context>

<pallas_src>
import functools

import numpy as np

import jax
import jax.numpy as jnp
from jax import lax
from jax.experimental import pallas as pl
from jax.experimental.pallas import tpu as pltpu


def _fps_kernel(init_ref, pos_ref, pos_flat_ref, out_ref, dist_ref, cent_ref,
                *, npoints, n_real):
    """One grid step == one batch element.

    init_ref     : SMEM (B,)        int32  scalar-prefetched initial farthest index
    pos_ref      : VMEM (C, 8, N8)  f32    sublane+lane packed points (idx = s*N8 + l)
    pos_flat_ref : SMEM (B, C*N)    f32    flat copy; centroid gather = C scalar sld
    out_ref      : VMEM (1, n_out)  int32  this batch's centroid indices (lane-padded)
    dist_ref     : VMEM (8, N8)     f32    running min squared distance (scratch)
    cent_ref     : SMEM (npoints,)  int32  chosen index per iteration (scratch)
    """
    b = pl.program_id(0)
    C = pos_ref.shape[0]
    S, L = dist_ref.shape                      # (8, N8)
    n_out = out_ref.shape[-1]

    # Global point index of each (sublane, lane) slot: idx = sublane*N8 + lane.
    point_ids = (lax.broadcasted_iota(jnp.int32, (S, L), 0) * L
                 + lax.broadcasted_iota(jnp.int32, (S, L), 1))

    # torch reference: distance = 1e10 * ones(N).  Sublane-padding slots get -1
    # so they can never win the argmax (real squared distances are >= 0).
    dist_ref[...] = jnp.where(point_ids < n_real,
                              jnp.full((S, L), 1e10, dtype=jnp.float32),
                              jnp.full((S, L), -1.0, dtype=jnp.float32))

    def body(i, farthest):
        # centroids[:, i] = farthest — one scalar SMEM store, no vector carry.
        cent_ref[i] = farthest

        # dist = sum((pos - pos[farthest])**2, -1):
        # C scalar SMEM reads for the centroid, then C sublane-packed VPU
        # passes over (8, N8).  No cross-lane/sublane work until the reduces.
        d = None
        for c in range(C):
            cen_c = pos_flat_ref[b, c * n_real + farthest]   # scalar f32 (sld)
            diff = pos_ref[c] - cen_c                        # (8, N8)
            sq = diff * diff
            d = sq if d is None else d + sq

        # distance = min(distance, dist): one scratch read + one scratch write.
        new_dist = jnp.minimum(dist_ref[...], d)
        dist_ref[...] = new_dist

        # farthest = argmax(distance), first occurrence on ties (min global
        # index among the maxima); both reductions run on the register copy.
        m = jnp.max(new_dist)
        cand = jnp.where(new_dist == m, point_ids, S * L)
        return jnp.min(cand).astype(jnp.int32)

    lax.fori_loop(0, npoints, body, init_ref[b], unroll=npoints <= 16)

    # Build the lane-dense output row once from the SMEM scratch and store it
    # with a single unmasked vector store.
    slot_ids = lax.broadcasted_iota(jnp.int32, (1, n_out), 1)

    def fill(i, vec):
        return jnp.where(slot_ids == i, cent_ref[i], vec)

    out_ref[...] = lax.fori_loop(0, npoints, fill,
                                 jnp.zeros((1, n_out), dtype=jnp.int32),
                                 unroll=npoints <= 16)


def farthest_point_sampler(pos, init_farthest, npoints):
    """pos: (B, N, C) f32, init_farthest: (B,) int32 -> (B, npoints) int32."""
    B, N, C = pos.shape
    pos = pos.astype(jnp.float32)
    init_farthest = init_farthest.astype(jnp.int32)

    n8 = pl.cdiv(N, 8)                        # lanes per sublane row
    n_pad8 = n8 * 8                           # points incl. sublane padding
    n_out = pl.cdiv(npoints, 128) * 128       # lane-dense output row

    pos_cn = jnp.transpose(pos, (0, 2, 1))                 # (B, C, N)
    pos_flat = pos_cn.reshape(B, C * N)                    # SMEM gather table
    if n_pad8 != N:
        pos_cn = jnp.pad(pos_cn, ((0, 0), (0, 0), (0, n_pad8 - N)))
    pos_packed = pos_cn.reshape(B, C, 8, n8)               # point n -> (n//n8, n%n8)

    # VMEM budget: double-buffered packed points + dist scratch + output block,
    # with 4x headroom, capped at v7x's 64 MiB physical VMEM.
    block_bytes = 4 * (2 * C * 8 * n8 + 8 * n8 + 2 * n_out)
    vmem_limit = int(min(64 * 1024 * 1024, max(4 * 1024 * 1024, 4 * block_bytes)))

    # TODO(synk): PyTorch returns int64 (torch.long) indices; int32 is used here
    # since JAX x64 is off by default and N easily fits in int32.
    kernel = functools.partial(_fps_kernel, npoints=npoints, n_real=N)
    out = pl.pallas_call(
        kernel,
        out_shape=jax.ShapeDtypeStruct((B, 1, n_out), jnp.int32),
        grid_spec=pltpu.PrefetchScalarGridSpec(
            num_scalar_prefetch=1,                   # init_farthest -> SMEM
            grid=(B,),
            in_specs=[
                # Single pipelined VMEM input: the sublane+lane-packed points,
                # full-N per batch so the HBM->VMEM copy is issued once and
                # amortized over all npoints serial iterations.
                pl.BlockSpec((None, C, 8, n8), lambda b, init: (b, 0, 0, 0)),
                # Flat centroid-gather table, whole array resident in SMEM.
                pl.BlockSpec(memory_space=pltpu.MemorySpace.SMEM),
            ],
            out_specs=pl.BlockSpec((None, 1, n_out), lambda b, init: (b, 0, 0)),
            scratch_shapes=[
                pltpu.VMEM((8, n8), jnp.float32),     # running min distance
                pltpu.SMEM((npoints,), jnp.int32),    # per-iteration indices
            ],
        ),
        compiler_params=pltpu.CompilerParams(
            dimension_semantics=("parallel",),        # batches are independent
            vmem_limit_bytes=vmem_limit,
        ),
    )(init_farthest, pos_packed, pos_flat)
    return out[:, 0, :npoints]


def _fps_reference(pos, init_farthest, npoints):
    """Pure-JAX port of the PyTorch FPS loop, for verification."""
    B, N, C = pos.shape
    centroids = jnp.zeros((B, npoints), dtype=jnp.int32)
    distance = jnp.full((B, N), 1e10, dtype=jnp.float32)
    farthest = init_farthest.astype(jnp.int32)
    batch_indices = jnp.arange(B)
    for i in range(npoints):
        centroids = centroids.at[:, i].set(farthest)
        centroid = pos[batch_indices, farthest, :][:, None, :]       # (B, 1, C)
        dist = jnp.sum((pos - centroid) ** 2, axis=-1)               # (B, N)
        distance = jnp.minimum(distance, dist)
        farthest = jnp.argmax(distance, axis=-1).astype(jnp.int32)
    return centroids


if __name__ == "__main__":
    key = jax.random.PRNGKey(0)
    k_pos, k_init = jax.random.split(key)

    B, N, C, npoints = 2, 128, 3, 8
    pos = jax.random.normal(k_pos, (B, N, C), dtype=jnp.float32)
    init_farthest = jax.random.randint(k_init, (B,), 0, N, dtype=jnp.int32)

    out = farthest_point_sampler(pos, init_farthest, npoints)
    out = jax.block_until_ready(out)

    ref = _fps_reference(pos, init_farthest, npoints)
    assert out.shape == (B, npoints) and out.dtype == jnp.int32
    np.testing.assert_array_equal(np.asarray(out), np.asarray(ref))

    print("KERNEL_OK")
</pallas_src>

<mosaic_0001>
module attributes {stable_mosaic.version = 11 : i64} {
  func.func @_fps_kernel(%arg0: i32, %arg1: memref<2xi32, #tpu.memory_space<smem>>, %arg2: memref<1x3x8x16xf32, #tpu.memory_space<vmem>>, %arg3: memref<2x384xf32, #tpu.memory_space<smem>>, %arg4: memref<1x1x128xi32, #tpu.memory_space<vmem>>, %arg5: memref<8x16xf32, #tpu.memory_space<vmem>>, %arg6: memref<8xi32, #tpu.memory_space<smem>>) attributes {dimension_semantics = [#tpu.dimension_semantics<parallel>], iteration_bounds = array<i64: 2>, scalar_prefetch = 1 : i64, scratch_operands = 2 : i64, tpu.core_type = #tpu.core_type<tc>, window_params = [{transform_indices = @transform_0, window_bounds = array<i64: 1, 3, 8, 16>}, {transform_indices = @transform_1, window_bounds = array<i64: 2, 384>}, {transform_indices = @transform_2, window_bounds = array<i64: 1, 1, 128>}]} {
    %0 = tpu.iota {dimensions = array<i32: 0>} : vector<8x16xi32>
    %c16_i32 = arith.constant 16 : i32
    %1 = vector.broadcast %c16_i32 : i32 to vector<8x16xi32>
    %2 = arith.muli %0, %1 : vector<8x16xi32>
    %3 = tpu.iota {dimensions = array<i32: 1>} : vector<8x16xi32>
    %4 = arith.addi %2, %3 : vector<8x16xi32>
    %c128_i32 = arith.constant 128 : i32
    %5 = vector.broadcast %c128_i32 : i32 to vector<8x16xi32>
    %6 = arith.cmpi slt, %4, %5 : vector<8x16xi32>
    %cst = arith.constant 1.000000e+10 : f32
    %7 = vector.broadcast %cst : f32 to vector<8x16xf32>
    %cst_0 = arith.constant -1.000000e+00 : f32
    %8 = vector.broadcast %cst_0 : f32 to vector<8x16xf32>
    %9 = arith.select %6, %7, %8 : vector<8x16xi1>, vector<8x16xf32>
    %c0 = arith.constant 0 : index
    %c0_1 = arith.constant 0 : index
    %10 = vector.load %arg5[%c0, %c0_1] : memref<8x16xf32, #tpu.memory_space<vmem>>, vector<8x16xf32>
    tpu.vector_store %arg5[%c0, %c0_1], %9 {strides = array<i32>} : memref<8x16xf32, #tpu.memory_space<vmem>>, vector<8x16xf32>,
    %11 = arith.index_cast %arg0 : i32 to index
    %12 = memref.load %arg1[%11] : memref<2xi32, #tpu.memory_space<smem>>
    %c0_i32 = arith.constant 0 : i32
    %13 = arith.index_cast %c0_i32 : i32 to index
    %14 = memref.load %arg6[%13] : memref<8xi32, #tpu.memory_space<smem>>
    memref.store %12, %arg6[%13] : memref<8xi32, #tpu.memory_space<smem>>
    %c0_i32_2 = arith.constant 0 : i32
    %15 = arith.addi %c0_i32_2, %12 : i32
    %16 = arith.index_cast %arg0 : i32 to index
    %17 = arith.index_cast %15 : i32 to index
    %18 = memref.load %arg3[%16, %17] : memref<2x384xf32, #tpu.memory_space<smem>>
    %c0_3 = arith.constant 0 : index
    %c0_4 = arith.constant 0 : index
    %c0_5 = arith.constant 0 : index
    %c0_6 = arith.constant 0 : index
    %19 = vector.load %arg2[%c0_3, %c0_4, %c0_5, %c0_6] : memref<1x3x8x16xf32, #tpu.memory_space<vmem>>, vector<1x1x8x16xf32>
    %20 = vector.shape_cast %19 : vector<1x1x8x16xf32> to vector<8x16xf32>
    %21 = vector.broadcast %18 : f32 to vector<8x16xf32>
    %22 = arith.subf %20, %21 : vector<8x16xf32>
    %23 = arith.mulf %22, %22 : vector<8x16xf32>
    %c128_i32_7 = arith.constant 128 : i32
    %24 = arith.addi %c128_i32_7, %12 : i32
    %25 = arith.index_cast %arg0 : i32 to index
    %26 = arith.index_cast %24 : i32 to index
    %27 = memref.load %arg3[%25, %26] : memref<2x384xf32, #tpu.memory_space<smem>>
    %c0_8 = arith.constant 0 : index
    %c1 = arith.constant 1 : index
    %c0_9 = arith.constant 0 : index
    %c0_10 = arith.constant 0 : index
    %28 = vector.load %arg2[%c0_8, %c1, %c0_9, %c0_10] : memref<1x3x8x16xf32, #tpu.memory_space<vmem>>, vector<1x1x8x16xf32>
    %29 = vector.shape_cast %28 : vector<1x1x8x16xf32> to vector<8x16xf32>
    %30 = vector.broadcast %27 : f32 to vector<8x16xf32>
    %31 = arith.subf %29, %30 : vector<8x16xf32>
    %32 = arith.mulf %31, %31 : vector<8x16xf32>
    %33 = arith.addf %23, %32 : vector<8x16xf32>
    %c256_i32 = arith.constant 256 : i32
    %34 = arith.addi %c256_i32, %12 : i32
    %35 = arith.index_cast %arg0 : i32 to index
    %36 = arith.index_cast %34 : i32 to index
    %37 = memref.load %arg3[%35, %36] : memref<2x384xf32, #tpu.memory_space<smem>>
    %c0_11 = arith.constant 0 : index
    %c2 = arith.constant 2 : index
    %c0_12 = arith.constant 0 : index
    %c0_13 = arith.constant 0 : index
    %38 = vector.load %arg2[%c0_11, %c2, %c0_12, %c0_13] : memref<1x3x8x16xf32, #tpu.memory_space<vmem>>, vector<1x1x8x16xf32>
    %39 = vector.shape_cast %38 : vector<1x1x8x16xf32> to vector<8x16xf32>
    %40 = vector.broadcast %37 : f32 to vector<8x16xf32>
    %41 = arith.subf %39, %40 : vector<8x16xf32>
    %42 = arith.mulf %41, %41 : vector<8x16xf32>
    %43 = arith.addf %33, %42 : vector<8x16xf32>
    %c0_14 = arith.constant 0 : index
    %c0_15 = arith.constant 0 : index
    %44 = vector.load %arg5[%c0_14, %c0_15] : memref<8x16xf32, #tpu.memory_space<vmem>>, vector<8x16xf32>
    %45 = arith.minimumf %44, %43 : vector<8x16xf32>
    %c0_16 = arith.constant 0 : index
    %c0_17 = arith.constant 0 : index
    %46 = vector.load %arg5[%c0_16, %c0_17] : memref<8x16xf32, #tpu.memory_space<vmem>>, vector<8x16xf32>
    tpu.vector_store %arg5[%c0_16, %c0_17], %45 {strides = array<i32>} : memref<8x16xf32, #tpu.memory_space<vmem>>, vector<8x16xf32>,
    %47 = vector.shape_cast %45 : vector<8x16xf32> to vector<1x8x16xf32>
    %cst_18 = arith.constant dense<0xFF800000> : vector<1xf32>
    %48 = vector.multi_reduction <maximumf>, %47, %cst_18 [1, 2] : vector<1x8x16xf32> to vector<1xf32>
    %49 = vector.shape_cast %48 : vector<1xf32> to vector<1x1x1xf32>
    %50 = vector.extract %49[0, 0, 0] : f32 from vector<1x1x1xf32>
    %51 = vector.broadcast %50 : f32 to vector<8x16xf32>
    %52 = arith.cmpf oeq, %45, %51 : vector<8x16xf32>
    %c128_i32_19 = arith.constant 128 : i32
    %53 = vector.broadcast %c128_i32_19 : i32 to vector<8x16xi32>
    %54 = arith.select %52, %4, %53 : vector<8x16xi1>, vector<8x16xi32>
    %55 = vector.shape_cast %54 : vector<8x16xi32> to vector<1x8x16xi32>
    %cst_20 = arith.constant dense<2147483647> : vector<1xi32>
    %56 = vector.multi_reduction <minsi>, %55, %cst_20 [1, 2] : vector<1x8x16xi32> to vector<1xi32>
    %57 = vector.shape_cast %56 : vector<1xi32> to vector<1x1x1xi32>
    %58 = vector.extract %57[0, 0, 0] : i32 from vector<1x1x1xi32>
    %c1_i32 = arith.constant 1 : i32
    %59 = arith.index_cast %c1_i32 : i32 to index
    %60 = memref.load %arg6[%59] : memref<8xi32, #tpu.memory_space<smem>>
    memref.store %58, %arg6[%59] : memref<8xi32, #tpu.memory_space<smem>>
    %c0_i32_21 = arith.constant 0 : i32
    %61 = arith.addi %c0_i32_21, %58 : i32
    %62 = arith.index_cast %arg0 : i32 to index
    %63 = arith.index_cast %61 : i32 to index
    %64 = memref.load %arg3[%62, %63] : memref<2x384xf32, #tpu.memory_space<smem>>
    %c0_22 = arith.constant 0 : index
    %c0_23 = arith.constant 0 : index
    %c0_24 = arith.constant 0 : index
    %c0_25 = arith.constant 0 : index
    %65 = vector.load %arg2[%c0_22, %c0_23, %c0_24, %c0_25] : memref<1x3x8x16xf32, #tpu.memory_space<vmem>>, vector<1x1x8x16xf32>
    %66 = vector.shape_cast %65 : vector<1x1x8x16xf32> to vector<8x16xf32>
    %67 = vector.broadcast %64 : f32 to vector<8x16xf32>
    %68 = arith.subf %66, %67 : vector<8x16xf32>
    %69 = arith.mulf %68, %68 : vector<8x16xf32>
    %c128_i32_26 = arith.constant 128 : i32
    %70 = arith.addi %c128_i32_26, %58 : i32
    %71 = arith.index_cast %arg0 : i32 to index
    %72 = arith.index_cast %70 : i32 to index
    %73 = memref.load %arg3[%71, %72] : memref<2x384xf32, #tpu.memory_space<smem>>
    %c0_27 = arith.constant 0 : index
    %c1_28 = arith.constant 1 : index
    %c0_29 = arith.constant 0 : index
    %c0_30 = arith.constant 0 : index
    %74 = vector.load %arg2[%c0_27, %c1_28, %c0_29, %c0_30] : memref<1x3x8x16xf32, #tpu.memory_space<vmem>>, vector<1x1x8x16xf32>
    %75 = vector.shape_cast %74 : vector<1x1x8x16xf32> to vector<8x16xf32>
    %76 = vector.broadcast %73 : f32 to vector<8x16xf32>
    %77 = arith.subf %75, %76 : vector<8x16xf32>
    %78 = arith.mulf %77, %77 : vector<8x16xf32>
    %79 = arith.addf %69, %78 : vector<8x16xf32>
    %c256_i32_31 = arith.constant 256 : i32
    %80 = arith.addi %c256_i32_31, %58 : i32
    %81 = arith.index_cast %arg0 : i32 to index
    %82 = arith.index_cast %80 : i32 to index
    %83 = memref.load %arg3[%81, %82] : memref<2x384xf32, #tpu.memory_space<smem>>
    %c0_32 = arith.constant 0 : index
    %c2_33 = arith.constant 2 : index
    %c0_34 = arith.constant 0 : index
    %c0_35 = arith.constant 0 : index
    %84 = vector.load %arg2[%c0_32, %c2_33, %c0_34, %c0_35] : memref<1x3x8x16xf32, #tpu.memory_space<vmem>>, vector<1x1x8x16xf32>
    %85 = vector.shape_cast %84 : vector<1x1x8x16xf32> to vector<8x16xf32>
    %86 = vector.broadcast %83 : f32 to vector<8x16xf32>
    %87 = arith.subf %85, %86 : vector<8x16xf32>
    %88 = arith.mulf %87, %87 : vector<8x16xf32>
    %89 = arith.addf %79, %88 : vector<8x16xf32>
    %c0_36 = arith.constant 0 : index
    %c0_37 = arith.constant 0 : index
    %90 = vector.load %arg5[%c0_36, %c0_37] : memref<8x16xf32, #tpu.memory_space<vmem>>, vector<8x16xf32>
    %91 = arith.minimumf %90, %89 : vector<8x16xf32>
    %c0_38 = arith.constant 0 : index
    %c0_39 = arith.constant 0 : index
    %92 = vector.load %arg5[%c0_38, %c0_39] : memref<8x16xf32, #tpu.memory_space<vmem>>, vector<8x16xf32>
    tpu.vector_store %arg5[%c0_38, %c0_39], %91 {strides = array<i32>} : memref<8x16xf32, #tpu.memory_space<vmem>>, vector<8x16xf32>,
    %93 = vector.shape_cast %91 : vector<8x16xf32> to vector<1x8x16xf32>
    %cst_40 = arith.constant dense<0xFF800000> : vector<1xf32>
    %94 = vector.multi_reduction <maximumf>, %93, %cst_40 [1, 2] : vector<1x8x16xf32> to vector<1xf32>
    %95 = vector.shape_cast %94 : vector<1xf32> to vector<1x1x1xf32>
    %96 = vector.extract %95[0, 0, 0] : f32 from vector<1x1x1xf32>
    %97 = vector.broadcast %96 : f32 to vector<8x16xf32>
    %98 = arith.cmpf oeq, %91, %97 : vector<8x16xf32>
    %c128_i32_41 = arith.constant 128 : i32
    %99 = vector.broadcast %c128_i32_41 : i32 to vector<8x16xi32>
    %100 = arith.select %98, %4, %99 : vector<8x16xi1>, vector<8x16xi32>
    %101 = vector.shape_cast %100 : vector<8x16xi32> to vector<1x8x16xi32>
    %cst_42 = arith.constant dense<2147483647> : vector<1xi32>
    %102 = vector.multi_reduction <minsi>, %101, %cst_42 [1, 2] : vector<1x8x16xi32> to vector<1xi32>
    %103 = vector.shape_cast %102 : vector<1xi32> to vector<1x1x1xi32>
    %104 = vector.extract %103[0, 0, 0] : i32 from vector<1x1x1xi32>
    %c2_i32 = arith.constant 2 : i32
    %105 = arith.index_cast %c2_i32 : i32 to index
    %106 = memref.load %arg6[%105] : memref<8xi32, #tpu.memory_space<smem>>
    memref.store %104, %arg6[%105] : memref<8xi32, #tpu.memory_space<smem>>
    %c0_i32_43 = arith.constant 0 : i32
    %107 = arith.addi %c0_i32_43, %104 : i32
    %108 = arith.index_cast %arg0 : i32 to index
    %109 = arith.index_cast %107 : i32 to index
    %110 = memref.load %arg3[%108, %109] : memref<2x384xf32, #tpu.memory_space<smem>>
    %c0_44 = arith.constant 0 : index
    %c0_45 = arith.constant 0 : index
    %c0_46 = arith.constant 0 : index
    %c0_47 = arith.constant 0 : index
    %111 = vector.load %arg2[%c0_44, %c0_45, %c0_46, %c0_47] : memref<1x3x8x16xf32, #tpu.memory_space<vmem>>, vector<1x1x8x16xf32>
    %112 = vector.shape_cast %111 : vector<1x1x8x16xf32> to vector<8x16xf32>
    %113 = vector.broadcast %110 : f32 to vector<8x16xf32>
    %114 = arith.subf %112, %113 : vector<8x16xf32>
    %115 = arith.mulf %114, %114 : vector<8x16xf32>
    %c128_i32_48 = arith.constant 128 : i32
    %116 = arith.addi %c128_i32_48, %104 : i32
    %117 = arith.index_cast %arg0 : i32 to index
    %118 = arith.index_cast %116 : i32 to index
    %119 = memref.load %arg3[%117, %118] : memref<2x384xf32, #tpu.memory_space<smem>>
    %c0_49 = arith.constant 0 : index
    %c1_50 = arith.constant 1 : index
    %c0_51 = arith.constant 0 : index
    %c0_52 = arith.constant 0 : index
    %120 = vector.load %arg2[%c0_49, %c1_50, %c0_51, %c0_52] : memref<1x3x8x16xf32, #tpu.memory_space<vmem>>, vector<1x1x8x16xf32>
    %121 = vector.shape_cast %120 : vector<1x1x8x16xf32> to vector<8x16xf32>
    %122 = vector.broadcast %119 : f32 to vector<8x16xf32>
    %123 = arith.subf %121, %122 : vector<8x16xf32>
    %124 = arith.mulf %123, %123 : vector<8x16xf32>
    %125 = arith.addf %115, %124 : vector<8x16xf32>
    %c256_i32_53 = arith.constant 256 : i32
    %126 = arith.addi %c256_i32_53, %104 : i32
    %127 = arith.index_cast %arg0 : i32 to index
    %128 = arith.index_cast %126 : i32 to index
    %129 = memref.load %arg3[%127, %128] : memref<2x384xf32, #tpu.memory_space<smem>>
    %c0_54 = arith.constant 0 : index
    %c2_55 = arith.constant 2 : index
    %c0_56 = arith.constant 0 : index
    %c0_57 = arith.constant 0 : index
    %130 = vector.load %arg2[%c0_54, %c2_55, %c0_56, %c0_57] : memref<1x3x8x16xf32, #tpu.memory_space<vmem>>, vector<1x1x8x16xf32>
    %131 = vector.shape_cast %130 : vector<1x1x8x16xf32> to vector<8x16xf32>
    %132 = vector.broadcast %129 : f32 to vector<8x16xf32>
    %133 = arith.subf %131, %132 : vector<8x16xf32>
    %134 = arith.mulf %133, %133 : vector<8x16xf32>
    %135 = arith.addf %125, %134 : vector<8x16xf32>
    %c0_58 = arith.constant 0 : index
    %c0_59 = arith.constant 0 : index
    %136 = vector.load %arg5[%c0_58, %c0_59] : memref<8x16xf32, #tpu.memory_space<vmem>>, vector<8x16xf32>
    %137 = arith.minimumf %136, %135 : vector<8x16xf32>
    %c0_60 = arith.constant 0 : index
    %c0_61 = arith.constant 0 : index
    %138 = vector.load %arg5[%c0_60, %c0_61] : memref<8x16xf32, #tpu.memory_space<vmem>>, vector<8x16xf32>
    tpu.vector_store %arg5[%c0_60, %c0_61], %137 {strides = array<i32>} : memref<8x16xf32, #tpu.memory_space<vmem>>, vector<8x16xf32>,
    %139 = vector.shape_cast %137 : vector<8x16xf32> to vector<1x8x16xf32>
    %cst_62 = arith.constant dense<0xFF800000> : vector<1xf32>
    %140 = vector.multi_reduction <maximumf>, %139, %cst_62 [1, 2] : vector<1x8x16xf32> to vector<1xf32>
    %141 = vector.shape_cast %140 : vector<1xf32> to vector<1x1x1xf32>
    %142 = vector.extract %141[0, 0, 0] : f32 from vector<1x1x1xf32>
    %143 = vector.broadcast %142 : f32 to vector<8x16xf32>
    %144 = arith.cmpf oeq, %137, %143 : vector<8x16xf32>
    %c128_i32_63 = arith.constant 128 : i32
    %145 = vector.broadcast %c128_i32_63 : i32 to vector<8x16xi32>
    %146 = arith.select %144, %4, %145 : vector<8x16xi1>, vector<8x16xi32>
    %147 = vector.shape_cast %146 : vector<8x16xi32> to vector<1x8x16xi32>
    %cst_64 = arith.constant dense<2147483647> : vector<1xi32>
    %148 = vector.multi_reduction <minsi>, %147, %cst_64 [1, 2] : vector<1x8x16xi32> to vector<1xi32>
    %149 = vector.shape_cast %148 : vector<1xi32> to vector<1x1x1xi32>
    %150 = vector.extract %149[0, 0, 0] : i32 from vector<1x1x1xi32>
    %c3_i32 = arith.constant 3 : i32
    %151 = arith.index_cast %c3_i32 : i32 to index
    %152 = memref.load %arg6[%151] : memref<8xi32, #tpu.memory_space<smem>>
    memref.store %150, %arg6[%151] : memref<8xi32, #tpu.memory_space<smem>>
    %c0_i32_65 = arith.constant 0 : i32
    %153 = arith.addi %c0_i32_65, %150 : i32
    %154 = arith.index_cast %arg0 : i32 to index
    %155 = arith.index_cast %153 : i32 to index
    %156 = memref.load %arg3[%154, %155] : memref<2x384xf32, #tpu.memory_space<smem>>
    %c0_66 = arith.constant 0 : index
    %c0_67 = arith.constant 0 : index
    %c0_68 = arith.constant 0 : index
    %c0_69 = arith.constant 0 : index
    %157 = vector.load %arg2[%c0_66, %c0_67, %c0_68, %c0_69] : memref<1x3x8x16xf32, #tpu.memory_space<vmem>>, vector<1x1x8x16xf32>
    %158 = vector.shape_cast %157 : vector<1x1x8x16xf32> to vector<8x16xf32>
    %159 = vector.broadcast %156 : f32 to vector<8x16xf32>
    %160 = arith.subf %158, %159 : vector<8x16xf32>
    %161 = arith.mulf %160, %160 : vector<8x16xf32>
    %c128_i32_70 = arith.constant 128 : i32
    %162 = arith.addi %c128_i32_70, %150 : i32
    %163 = arith.index_cast %arg0 : i32 to index
    %164 = arith.index_cast %162 : i32 to index
    %165 = memref.load %arg3[%163, %164] : memref<2x384xf32, #tpu.memory_space<smem>>
    %c0_71 = arith.constant 0 : index
    %c1_72 = arith.constant 1 : index
    %c0_73 = arith.constant 0 : index
    %c0_74 = arith.constant 0 : index
    %166 = vector.load %arg2[%c0_71, %c1_72, %c0_73, %c0_74] : memref<1x3x8x16xf32, #tpu.memory_space<vmem>>, vector<1x1x8x16xf32>
    %167 = vector.shape_cast %166 : vector<1x1x8x16xf32> to vector<8x16xf32>
    %168 = vector.broadcast %165 : f32 to vector<8x16xf32>
    %169 = arith.subf %167, %168 : vector<8x16xf32>
    %170 = arith.mulf %169, %169 : vector<8x16xf32>
    %171 = arith.addf %161, %170 : vector<8x16xf32>
    %c256_i32_75 = arith.constant 256 : i32
    %172 = arith.addi %c256_i32_75, %150 : i32
    %173 = arith.index_cast %arg0 : i32 to index
    %174 = arith.index_cast %172 : i32 to index
    %175 = memref.load %arg3[%173, %174] : memref<2x384xf32, #tpu.memory_space<smem>>
    %c0_76 = arith.constant 0 : index
    %c2_77 = arith.constant 2 : index
    %c0_78 = arith.constant 0 : index
    %c0_79 = arith.constant 0 : index
    %176 = vector.load %arg2[%c0_76, %c2_77, %c0_78, %c0_79] : memref<1x3x8x16xf32, #tpu.memory_space<vmem>>, vector<1x1x8x16xf32>
    %177 = vector.shape_cast %176 : vector<1x1x8x16xf32> to vector<8x16xf32>
    %178 = vector.broadcast %175 : f32 to vector<8x16xf32>
    %179 = arith.subf %177, %178 : vector<8x16xf32>
    %180 = arith.mulf %179, %179 : vector<8x16xf32>
    %181 = arith.addf %171, %180 : vector<8x16xf32>
    %c0_80 = arith.constant 0 : index
    %c0_81 = arith.constant 0 : index
    %182 = vector.load %arg5[%c0_80, %c0_81] : memref<8x16xf32, #tpu.memory_space<vmem>>, vector<8x16xf32>
    %183 = arith.minimumf %182, %181 : vector<8x16xf32>
    %c0_82 = arith.constant 0 : index
    %c0_83 = arith.constant 0 : index
    %184 = vector.load %arg5[%c0_82, %c0_83] : memref<8x16xf32, #tpu.memory_space<vmem>>, vector<8x16xf32>
    tpu.vector_store %arg5[%c0_82, %c0_83], %183 {strides = array<i32>} : memref<8x16xf32, #tpu.memory_space<vmem>>, vector<8x16xf32>,
    %185 = vector.shape_cast %183 : vector<8x16xf32> to vector<1x8x16xf32>
    %cst_84 = arith.constant dense<0xFF800000> : vector<1xf32>
    %186 = vector.multi_reduction <maximumf>, %185, %cst_84 [1, 2] : vector<1x8x16xf32> to vector<1xf32>
    %187 = vector.shape_cast %186 : vector<1xf32> to vector<1x1x1xf32>
    %188 = vector.extract %187[0, 0, 0] : f32 from vector<1x1x1xf32>
    %189 = vector.broadcast %188 : f32 to vector<8x16xf32>
    %190 = arith.cmpf oeq, %183, %189 : vector<8x16xf32>
    %c128_i32_85 = arith.constant 128 : i32
    %191 = vector.broadcast %c128_i32_85 : i32 to vector<8x16xi32>
    %192 = arith.select %190, %4, %191 : vector<8x16xi1>, vector<8x16xi32>
    %193 = vector.shape_cast %192 : vector<8x16xi32> to vector<1x8x16xi32>
    %cst_86 = arith.constant dense<2147483647> : vector<1xi32>
    %194 = vector.multi_reduction <minsi>, %193, %cst_86 [1, 2] : vector<1x8x16xi32> to vector<1xi32>
    %195 = vector.shape_cast %194 : vector<1xi32> to vector<1x1x1xi32>
    %196 = vector.extract %195[0, 0, 0] : i32 from vector<1x1x1xi32>
    %c4_i32 = arith.constant 4 : i32
    %197 = arith.index_cast %c4_i32 : i32 to index
    %198 = memref.load %arg6[%197] : memref<8xi32, #tpu.memory_space<smem>>
    memref.store %196, %arg6[%197] : memref<8xi32, #tpu.memory_space<smem>>
    %c0_i32_87 = arith.constant 0 : i32
    %199 = arith.addi %c0_i32_87, %196 : i32
    %200 = arith.index_cast %arg0 : i32 to index
    %201 = arith.index_cast %199 : i32 to index
    %202 = memref.load %arg3[%200, %201] : memref<2x384xf32, #tpu.memory_space<smem>>
    %c0_88 = arith.constant 0 : index
    %c0_89 = arith.constant 0 : index
    %c0_90 = arith.constant 0 : index
    %c0_91 = arith.constant 0 : index
    %203 = vector.load %arg2[%c0_88, %c0_89, %c0_90, %c0_91] : memref<1x3x8x16xf32, #tpu.memory_space<vmem>>, vector<1x1x8x16xf32>
    %204 = vector.shape_cast %203 : vector<1x1x8x16xf32> to vector<8x16xf32>
    %205 = vector.broadcast %202 : f32 to vector<8x16xf32>
    %206 = arith.subf %204, %205 : vector<8x16xf32>
    %207 = arith.mulf %206, %206 : vector<8x16xf32>
    %c128_i32_92 = arith.constant 128 : i32
    %208 = arith.addi %c128_i32_92, %196 : i32
    %209 = arith.index_cast %arg0 : i32 to index
    %210 = arith.index_cast %208 : i32 to index
    %211 = memref.load %arg3[%209, %210] : memref<2x384xf32, #tpu.memory_space<smem>>
    %c0_93 = arith.constant 0 : index
    %c1_94 = arith.constant 1 : index
    %c0_95 = arith.constant 0 : index
    %c0_96 = arith.constant 0 : index
    %212 = vector.load %arg2[%c0_93, %c1_94, %c0_95, %c0_96] : memref<1x3x8x16xf32, #tpu.memory_space<vmem>>, vector<1x1x8x16xf32>
    %213 = vector.shape_cast %212 : vector<1x1x8x16xf32> to vector<8x16xf32>
    %214 = vector.broadcast %211 : f32 to vector<8x16xf32>
    %215 = arith.subf %213, %214 : vector<8x16xf32>
    %216 = arith.mulf %215, %215 : vector<8x16xf32>
    %217 = arith.addf %207, %216 : vector<8x16xf32>
    %c256_i32_97 = arith.constant 256 : i32
    %218 = arith.addi %c256_i32_97, %196 : i32
    %219 = arith.index_cast %arg0 : i32 to index
    %220 = arith.index_cast %218 : i32 to index
    %221 = memref.load %arg3[%219, %220] : memref<2x384xf32, #tpu.memory_space<smem>>
    %c0_98 = arith.constant 0 : index
    %c2_99 = arith.constant 2 : index
    %c0_100 = arith.constant 0 : index
    %c0_101 = arith.constant 0 : index
    %222 = vector.load %arg2[%c0_98, %c2_99, %c0_100, %c0_101] : memref<1x3x8x16xf32, #tpu.memory_space<vmem>>, vector<1x1x8x16xf32>
    %223 = vector.shape_cast %222 : vector<1x1x8x16xf32> to vector<8x16xf32>
    %224 = vector.broadcast %221 : f32 to vector<8x16xf32>
    %225 = arith.subf %223, %224 : vector<8x16xf32>
    %226 = arith.mulf %225, %225 : vector<8x16xf32>
    %227 = arith.addf %217, %226 : vector<8x16xf32>
    %c0_102 = arith.constant 0 : index
    %c0_103 = arith.constant 0 : index
    %228 = vector.load %arg5[%c0_102, %c0_103] : memref<8x16xf32, #tpu.memory_space<vmem>>, vector<8x16xf32>
    %229 = arith.minimumf %228, %227 : vector<8x16xf32>
    %c0_104 = arith.constant 0 : index
    %c0_105 = arith.constant 0 : index
    %230 = vector.load %arg5[%c0_104, %c0_105] : memref<8x16xf32, #tpu.memory_space<vmem>>, vector<8x16xf32>
    tpu.vector_store %arg5[%c0_104, %c0_105], %229 {strides = array<i32>} : memref<8x16xf32, #tpu.memory_space<vmem>>, vector<8x16xf32>,
    %231 = vector.shape_cast %229 : vector<8x16xf32> to vector<1x8x16xf32>
    %cst_106 = arith.constant dense<0xFF800000> : vector<1xf32>
    %232 = vector.multi_reduction <maximumf>, %231, %cst_106 [1, 2] : vector<1x8x16xf32> to vector<1xf32>
    %233 = vector.shape_cast %232 : vector<1xf32> to vector<1x1x1xf32>
    %234 = vector.extract %233[0, 0, 0] : f32 from vector<1x1x1xf32>
    %235 = vector.broadcast %234 : f32 to vector<8x16xf32>
    %236 = arith.cmpf oeq, %229, %235 : vector<8x16xf32>
    %c128_i32_107 = arith.constant 128 : i32
    %237 = vector.broadcast %c128_i32_107 : i32 to vector<8x16xi32>
    %238 = arith.select %236, %4, %237 : vector<8x16xi1>, vector<8x16xi32>
    %239 = vector.shape_cast %238 : vector<8x16xi32> to vector<1x8x16xi32>
    %cst_108 = arith.constant dense<2147483647> : vector<1xi32>
    %240 = vector.multi_reduction <minsi>, %239, %cst_108 [1, 2] : vector<1x8x16xi32> to vector<1xi32>
    %241 = vector.shape_cast %240 : vector<1xi32> to vector<1x1x1xi32>
    %242 = vector.extract %241[0, 0, 0] : i32 from vector<1x1x1xi32>
    %c5_i32 = arith.constant 5 : i32
    %243 = arith.index_cast %c5_i32 : i32 to index
    %244 = memref.load %arg6[%243] : memref<8xi32, #tpu.memory_space<smem>>
    memref.store %242, %arg6[%243] : memref<8xi32, #tpu.memory_space<smem>>
    %c0_i32_109 = arith.constant 0 : i32
    %245 = arith.addi %c0_i32_109, %242 : i32
    %246 = arith.index_cast %arg0 : i32 to index
    %247 = arith.index_cast %245 : i32 to index
    %248 = memref.load %arg3[%246, %247] : memref<2x384xf32, #tpu.memory_space<smem>>
    %c0_110 = arith.constant 0 : index
    %c0_111 = arith.constant 0 : index
    %c0_112 = arith.constant 0 : index
    %c0_113 = arith.constant 0 : index
    %249 = vector.load %arg2[%c0_110, %c0_111, %c0_112, %c0_113] : memref<1x3x8x16xf32, #tpu.memory_space<vmem>>, vector<1x1x8x16xf32>
    %250 = vector.shape_cast %249 : vector<1x1x8x16xf32> to vector<8x16xf32>
    %251 = vector.broadcast %248 : f32 to vector<8x16xf32>
    %252 = arith.subf %250, %251 : vector<8x16xf32>
    %253 = arith.mulf %252, %252 : vector<8x16xf32>
    %c128_i32_114 = arith.constant 128 : i32
    %254 = arith.addi %c128_i32_114, %242 : i32
    %255 = arith.index_cast %arg0 : i32 to index
    %256 = arith.index_cast %254 : i32 to index
    %257 = memref.load %arg3[%255, %256] : memref<2x384xf32, #tpu.memory_space<smem>>
    %c0_115 = arith.constant 0 : index
    %c1_116 = arith.constant 1 : index
    %c0_117 = arith.constant 0 : index
    %c0_118 = arith.constant 0 : index
    %258 = vector.load %arg2[%c0_115, %c1_116, %c0_117, %c0_118] : memref<1x3x8x16xf32, #tpu.memory_space<vmem>>, vector<1x1x8x16xf32>
    %259 = vector.shape_cast %258 : vector<1x1x8x16xf32> to vector<8x16xf32>
    %260 = vector.broadcast %257 : f32 to vector<8x16xf32>
    %261 = arith.subf %259, %260 : vector<8x16xf32>
    %262 = arith.mulf %261, %261 : vector<8x16xf32>
    %263 = arith.addf %253, %262 : vector<8x16xf32>
    %c256_i32_119 = arith.constant 256 : i32
    %264 = arith.addi %c256_i32_119, %242 : i32
    %265 = arith.index_cast %arg0 : i32 to index
    %266 = arith.index_cast %264 : i32 to index
    %267 = memref.load %arg3[%265, %266] : memref<2x384xf32, #tpu.memory_space<smem>>
    %c0_120 = arith.constant 0 : index
    %c2_121 = arith.constant 2 : index
    %c0_122 = arith.constant 0 : index
    %c0_123 = arith.constant 0 : index
    %268 = vector.load %arg2[%c0_120, %c2_121, %c0_122, %c0_123] : memref<1x3x8x16xf32, #tpu.memory_space<vmem>>, vector<1x1x8x16xf32>
    %269 = vector.shape_cast %268 : vector<1x1x8x16xf32> to vector<8x16xf32>
    %270 = vector.broadcast %267 : f32 to vector<8x16xf32>
    %271 = arith.subf %269, %270 : vector<8x16xf32>
    %272 = arith.mulf %271, %271 : vector<8x16xf32>
    %273 = arith.addf %263, %272 : vector<8x16xf32>
    %c0_124 = arith.constant 0 : index
    %c0_125 = arith.constant 0 : index
    %274 = vector.load %arg5[%c0_124, %c0_125] : memref<8x16xf32, #tpu.memory_space<vmem>>, vector<8x16xf32>
    %275 = arith.minimumf %274, %273 : vector<8x16xf32>
    %c0_126 = arith.constant 0 : index
    %c0_127 = arith.constant 0 : index
    %276 = vector.load %arg5[%c0_126, %c0_127] : memref<8x16xf32, #tpu.memory_space<vmem>>, vector<8x16xf32>
    tpu.vector_store %arg5[%c0_126, %c0_127], %275 {strides = array<i32>} : memref<8x16xf32, #tpu.memory_space<vmem>>, vector<8x16xf32>,
    %277 = vector.shape_cast %275 : vector<8x16xf32> to vector<1x8x16xf32>
    %cst_128 = arith.constant dense<0xFF800000> : vector<1xf32>
    %278 = vector.multi_reduction <maximumf>, %277, %cst_128 [1, 2] : vector<1x8x16xf32> to vector<1xf32>
    %279 = vector.shape_cast %278 : vector<1xf32> to vector<1x1x1xf32>
    %280 = vector.extract %279[0, 0, 0] : f32 from vector<1x1x1xf32>
    %281 = vector.broadcast %280 : f32 to vector<8x16xf32>
    %282 = arith.cmpf oeq, %275, %281 : vector<8x16xf32>
    %c128_i32_129 = arith.constant 128 : i32
    %283 = vector.broadcast %c128_i32_129 : i32 to vector<8x16xi32>
    %284 = arith.select %282, %4, %283 : vector<8x16xi1>, vector<8x16xi32>
    %285 = vector.shape_cast %284 : vector<8x16xi32> to vector<1x8x16xi32>
    %cst_130 = arith.constant dense<2147483647> : vector<1xi32>
    %286 = vector.multi_reduction <minsi>, %285, %cst_130 [1, 2] : vector<1x8x16xi32> to vector<1xi32>
    %287 = vector.shape_cast %286 : vector<1xi32> to vector<1x1x1xi32>
    %288 = vector.extract %287[0, 0, 0] : i32 from vector<1x1x1xi32>
    %c6_i32 = arith.constant 6 : i32
    %289 = arith.index_cast %c6_i32 : i32 to index
    %290 = memref.load %arg6[%289] : memref<8xi32, #tpu.memory_space<smem>>
    memref.store %288, %arg6[%289] : memref<8xi32, #tpu.memory_space<smem>>
    %c0_i32_131 = arith.constant 0 : i32
    %291 = arith.addi %c0_i32_131, %288 : i32
    %292 = arith.index_cast %arg0 : i32 to index
    %293 = arith.index_cast %291 : i32 to index
    %294 = memref.load %arg3[%292, %293] : memref<2x384xf32, #tpu.memory_space<smem>>
    %c0_132 = arith.constant 0 : index
    %c0_133 = arith.constant 0 : index
    %c0_134 = arith.constant 0 : index
    %c0_135 = arith.constant 0 : index
    %295 = vector.load %arg2[%c0_132, %c0_133, %c0_134, %c0_135] : memref<1x3x8x16xf32, #tpu.memory_space<vmem>>, vector<1x1x8x16xf32>
    %296 = vector.shape_cast %295 : vector<1x1x8x16xf32> to vector<8x16xf32>
    %297 = vector.broadcast %294 : f32 to vector<8x16xf32>
    %298 = arith.subf %296, %297 : vector<8x16xf32>
    %299 = arith.mulf %298, %298 : vector<8x16xf32>
    %c128_i32_136 = arith.constant 128 : i32
    %300 = arith.addi %c128_i32_136, %288 : i32
    %301 = arith.index_cast %arg0 : i32 to index
    %302 = arith.index_cast %300 : i32 to index
    %303 = memref.load %arg3[%301, %302] : memref<2x384xf32, #tpu.memory_space<smem>>
    %c0_137 = arith.constant 0 : index
    %c1_138 = arith.constant 1 : index
    %c0_139 = arith.constant 0 : index
    %c0_140 = arith.constant 0 : index
    %304 = vector.load %arg2[%c0_137, %c1_138, %c0_139, %c0_140] : memref<1x3x8x16xf32, #tpu.memory_space<vmem>>, vector<1x1x8x16xf32>
    %305 = vector.shape_cast %304 : vector<1x1x8x16xf32> to vector<8x16xf32>
    %306 = vector.broadcast %303 : f32 to vector<8x16xf32>
    %307 = arith.subf %305, %306 : vector<8x16xf32>
    %308 = arith.mulf %307, %307 : vector<8x16xf32>
    %309 = arith.addf %299, %308 : vector<8x16xf32>
    %c256_i32_141 = arith.constant 256 : i32
    %310 = arith.addi %c256_i32_141, %288 : i32
    %311 = arith.index_cast %arg0 : i32 to index
    %312 = arith.index_cast %310 : i32 to index
    %313 = memref.load %arg3[%311, %312] : memref<2x384xf32, #tpu.memory_space<smem>>
    %c0_142 = arith.constant 0 : index
    %c2_143 = arith.constant 2 : index
    %c0_144 = arith.constant 0 : index
    %c0_145 = arith.constant 0 : index
    %314 = vector.load %arg2[%c0_142, %c2_143, %c0_144, %c0_145] : memref<1x3x8x16xf32, #tpu.memory_space<vmem>>, vector<1x1x8x16xf32>
    %315 = vector.shape_cast %314 : vector<1x1x8x16xf32> to vector<8x16xf32>
    %316 = vector.broadcast %313 : f32 to vector<8x16xf32>
    %317 = arith.subf %315, %316 : vector<8x16xf32>
    %318 = arith.mulf %317, %317 : vector<8x16xf32>
    %319 = arith.addf %309, %318 : vector<8x16xf32>
    %c0_146 = arith.constant 0 : index
    %c0_147 = arith.constant 0 : index
    %320 = vector.load %arg5[%c0_146, %c0_147] : memref<8x16xf32, #tpu.memory_space<vmem>>, vector<8x16xf32>
    %321 = arith.minimumf %320, %319 : vector<8x16xf32>
    %c0_148 = arith.constant 0 : index
    %c0_149 = arith.constant 0 : index
    %322 = vector.load %arg5[%c0_148, %c0_149] : memref<8x16xf32, #tpu.memory_space<vmem>>, vector<8x16xf32>
    tpu.vector_store %arg5[%c0_148, %c0_149], %321 {strides = array<i32>} : memref<8x16xf32, #tpu.memory_space<vmem>>, vector<8x16xf32>,
    %323 = vector.shape_cast %321 : vector<8x16xf32> to vector<1x8x16xf32>
    %cst_150 = arith.constant dense<0xFF800000> : vector<1xf32>
    %324 = vector.multi_reduction <maximumf>, %323, %cst_150 [1, 2] : vector<1x8x16xf32> to vector<1xf32>
    %325 = vector.shape_cast %324 : vector<1xf32> to vector<1x1x1xf32>
    %326 = vector.extract %325[0, 0, 0] : f32 from vector<1x1x1xf32>
    %327 = vector.broadcast %326 : f32 to vector<8x16xf32>
    %328 = arith.cmpf oeq, %321, %327 : vector<8x16xf32>
    %c128_i32_151 = arith.constant 128 : i32
    %329 = vector.broadcast %c128_i32_151 : i32 to vector<8x16xi32>
    %330 = arith.select %328, %4, %329 : vector<8x16xi1>, vector<8x16xi32>
    %331 = vector.shape_cast %330 : vector<8x16xi32> to vector<1x8x16xi32>
    %cst_152 = arith.constant dense<2147483647> : vector<1xi32>
    %332 = vector.multi_reduction <minsi>, %331, %cst_152 [1, 2] : vector<1x8x16xi32> to vector<1xi32>
    %333 = vector.shape_cast %332 : vector<1xi32> to vector<1x1x1xi32>
    %334 = vector.extract %333[0, 0, 0] : i32 from vector<1x1x1xi32>
    %c7_i32 = arith.constant 7 : i32
    %335 = arith.index_cast %c7_i32 : i32 to index
    %336 = memref.load %arg6[%335] : memref<8xi32, #tpu.memory_space<smem>>
    memref.store %334, %arg6[%335] : memref<8xi32, #tpu.memory_space<smem>>
    %c0_i32_153 = arith.constant 0 : i32
    %337 = arith.addi %c0_i32_153, %334 : i32
    %338 = arith.index_cast %arg0 : i32 to index
    %339 = arith.index_cast %337 : i32 to index
    %340 = memref.load %arg3[%338, %339] : memref<2x384xf32, #tpu.memory_space<smem>>
    %c0_154 = arith.constant 0 : index
    %c0_155 = arith.constant 0 : index
    %c0_156 = arith.constant 0 : index
    %c0_157 = arith.constant 0 : index
    %341 = vector.load %arg2[%c0_154, %c0_155, %c0_156, %c0_157] : memref<1x3x8x16xf32, #tpu.memory_space<vmem>>, vector<1x1x8x16xf32>
    %342 = vector.shape_cast %341 : vector<1x1x8x16xf32> to vector<8x16xf32>
    %343 = vector.broadcast %340 : f32 to vector<8x16xf32>
    %344 = arith.subf %342, %343 : vector<8x16xf32>
    %345 = arith.mulf %344, %344 : vector<8x16xf32>
    %c128_i32_158 = arith.constant 128 : i32
    %346 = arith.addi %c128_i32_158, %334 : i32
    %347 = arith.index_cast %arg0 : i32 to index
    %348 = arith.index_cast %346 : i32 to index
    %349 = memref.load %arg3[%347, %348] : memref<2x384xf32, #tpu.memory_space<smem>>
    %c0_159 = arith.constant 0 : index
    %c1_160 = arith.constant 1 : index
    %c0_161 = arith.constant 0 : index
    %c0_162 = arith.constant 0 : index
    %350 = vector.load %arg2[%c0_159, %c1_160, %c0_161, %c0_162] : memref<1x3x8x16xf32, #tpu.memory_space<vmem>>, vector<1x1x8x16xf32>
    %351 = vector.shape_cast %350 : vector<1x1x8x16xf32> to vector<8x16xf32>
    %352 = vector.broadcast %349 : f32 to vector<8x16xf32>
    %353 = arith.subf %351, %352 : vector<8x16xf32>
    %354 = arith.mulf %353, %353 : vector<8x16xf32>
    %355 = arith.addf %345, %354 : vector<8x16xf32>
    %c256_i32_163 = arith.constant 256 : i32
    %356 = arith.addi %c256_i32_163, %334 : i32
    %357 = arith.index_cast %arg0 : i32 to index
    %358 = arith.index_cast %356 : i32 to index
    %359 = memref.load %arg3[%357, %358] : memref<2x384xf32, #tpu.memory_space<smem>>
    %c0_164 = arith.constant 0 : index
    %c2_165 = arith.constant 2 : index
    %c0_166 = arith.constant 0 : index
    %c0_167 = arith.constant 0 : index
    %360 = vector.load %arg2[%c0_164, %c2_165, %c0_166, %c0_167] : memref<1x3x8x16xf32, #tpu.memory_space<vmem>>, vector<1x1x8x16xf32>
    %361 = vector.shape_cast %360 : vector<1x1x8x16xf32> to vector<8x16xf32>
    %362 = vector.broadcast %359 : f32 to vector<8x16xf32>
    %363 = arith.subf %361, %362 : vector<8x16xf32>
    %364 = arith.mulf %363, %363 : vector<8x16xf32>
    %365 = arith.addf %355, %364 : vector<8x16xf32>
    %c0_168 = arith.constant 0 : index
    %c0_169 = arith.constant 0 : index
    %366 = vector.load %arg5[%c0_168, %c0_169] : memref<8x16xf32, #tpu.memory_space<vmem>>, vector<8x16xf32>
    %367 = arith.minimumf %366, %365 : vector<8x16xf32>
    %c0_170 = arith.constant 0 : index
    %c0_171 = arith.constant 0 : index
    %368 = vector.load %arg5[%c0_170, %c0_171] : memref<8x16xf32, #tpu.memory_space<vmem>>, vector<8x16xf32>
    tpu.vector_store %arg5[%c0_170, %c0_171], %367 {strides = array<i32>} : memref<8x16xf32, #tpu.memory_space<vmem>>, vector<8x16xf32>,
    %369 = vector.shape_cast %367 : vector<8x16xf32> to vector<1x8x16xf32>
    %cst_172 = arith.constant dense<0xFF800000> : vector<1xf32>
    %370 = vector.multi_reduction <maximumf>, %369, %cst_172 [1, 2] : vector<1x8x16xf32> to vector<1xf32>
    %371 = vector.shape_cast %370 : vector<1xf32> to vector<1x1x1xf32>
    %372 = vector.extract %371[0, 0, 0] : f32 from vector<1x1x1xf32>
    %373 = vector.broadcast %372 : f32 to vector<8x16xf32>
    %374 = arith.cmpf oeq, %367, %373 : vector<8x16xf32>
    %c128_i32_173 = arith.constant 128 : i32
    %375 = vector.broadcast %c128_i32_173 : i32 to vector<8x16xi32>
    %376 = arith.select %374, %4, %375 : vector<8x16xi1>, vector<8x16xi32>
    %377 = vector.shape_cast %376 : vector<8x16xi32> to vector<1x8x16xi32>
    %cst_174 = arith.constant dense<2147483647> : vector<1xi32>
    %378 = vector.multi_reduction <minsi>, %377, %cst_174 [1, 2] : vector<1x8x16xi32> to vector<1xi32>
    %379 = vector.shape_cast %378 : vector<1xi32> to vector<1x1x1xi32>
    %380 = vector.extract %379[0, 0, 0] : i32 from vector<1x1x1xi32>
    %c8_i32 = arith.constant 8 : i32
    %381 = tpu.iota {dimensions = array<i32: 1>} : vector<1x128xi32>
    %c0_i32_175 = arith.constant 0 : i32
    %382 = vector.broadcast %c0_i32_175 : i32 to vector<1x128xi32>
    %c0_i32_176 = arith.constant 0 : i32
    %383 = vector.broadcast %c0_i32_176 : i32 to vector<1x128xi32>
    %384 = arith.cmpi eq, %381, %383 : vector<1x128xi32>
    %385 = arith.index_cast %c0_i32_176 : i32 to index
    %386 = memref.load %arg6[%385] : memref<8xi32, #tpu.memory_space<smem>>
    %387 = vector.broadcast %386 : i32 to vector<1x128xi32>
    %388 = arith.select %384, %387, %382 : vector<1x128xi1>, vector<1x128xi32>
    %c1_i32_177 = arith.constant 1 : i32
    %389 = vector.broadcast %c1_i32_177 : i32 to vector<1x128xi32>
    %390 = arith.cmpi eq, %381, %389 : vector<1x128xi32>
    %391 = arith.index_cast %c1_i32_177 : i32 to index
    %392 = memref.load %arg6[%391] : memref<8xi32, #tpu.memory_space<smem>>
    %393 = vector.broadcast %392 : i32 to vector<1x128xi32>
    %394 = arith.select %390, %393, %388 : vector<1x128xi1>, vector<1x128xi32>
    %c2_i32_178 = arith.constant 2 : i32
    %395 = vector.broadcast %c2_i32_178 : i32 to vector<1x128xi32>
    %396 = arith.cmpi eq, %381, %395 : vector<1x128xi32>
    %397 = arith.index_cast %c2_i32_178 : i32 to index
    %398 = memref.load %arg6[%397] : memref<8xi32, #tpu.memory_space<smem>>
    %399 = vector.broadcast %398 : i32 to vector<1x128xi32>
    %400 = arith.select %396, %399, %394 : vector<1x128xi1>, vector<1x128xi32>
    %c3_i32_179 = arith.constant 3 : i32
    %401 = vector.broadcast %c3_i32_179 : i32 to vector<1x128xi32>
    %402 = arith.cmpi eq, %381, %401 : vector<1x128xi32>
    %403 = arith.index_cast %c3_i32_179 : i32 to index
    %404 = memref.load %arg6[%403] : memref<8xi32, #tpu.memory_space<smem>>
    %405 = vector.broadcast %404 : i32 to vector<1x128xi32>
    %406 = arith.select %402, %405, %400 : vector<1x128xi1>, vector<1x128xi32>
    %c4_i32_180 = arith.constant 4 : i32
    %407 = vector.broadcast %c4_i32_180 : i32 to vector<1x128xi32>
    %408 = arith.cmpi eq, %381, %407 : vector<1x128xi32>
    %409 = arith.index_cast %c4_i32_180 : i32 to index
    %410 = memref.load %arg6[%409] : memref<8xi32, #tpu.memory_space<smem>>
    %411 = vector.broadcast %410 : i32 to vector<1x128xi32>
    %412 = arith.select %408, %411, %406 : vector<1x128xi1>, vector<1x128xi32>
    %c5_i32_181 = arith.constant 5 : i32
    %413 = vector.broadcast %c5_i32_181 : i32 to vector<1x128xi32>
    %414 = arith.cmpi eq, %381, %413 : vector<1x128xi32>
    %415 = arith.index_cast %c5_i32_181 : i32 to index
    %416 = memref.load %arg6[%415] : memref<8xi32, #tpu.memory_space<smem>>
    %417 = vector.broadcast %416 : i32 to vector<1x128xi32>
    %418 = arith.select %414, %417, %412 : vector<1x128xi1>, vector<1x128xi32>
    %c6_i32_182 = arith.constant 6 : i32
    %419 = vector.broadcast %c6_i32_182 : i32 to vector<1x128xi32>
    %420 = arith.cmpi eq, %381, %419 : vector<1x128xi32>
    %421 = arith.index_cast %c6_i32_182 : i32 to index
    %422 = memref.load %arg6[%421] : memref<8xi32, #tpu.memory_space<smem>>
    %423 = vector.broadcast %422 : i32 to vector<1x128xi32>
    %424 = arith.select %420, %423, %418 : vector<1x128xi1>, vector<1x128xi32>
    %c7_i32_183 = arith.constant 7 : i32
    %425 = vector.broadcast %c7_i32_183 : i32 to vector<1x128xi32>
    %426 = arith.cmpi eq, %381, %425 : vector<1x128xi32>
    %427 = arith.index_cast %c7_i32_183 : i32 to index
    %428 = memref.load %arg6[%427] : memref<8xi32, #tpu.memory_space<smem>>
    %429 = vector.broadcast %428 : i32 to vector<1x128xi32>
    %430 = arith.select %426, %429, %424 : vector<1x128xi1>, vector<1x128xi32>
    %c8_i32_184 = arith.constant 8 : i32
    %c0_185 = arith.constant 0 : index
    %c0_186 = arith.constant 0 : index
    %c0_187 = arith.constant 0 : index
    %431 = vector.load %arg4[%c0_185, %c0_186, %c0_187] : memref<1x1x128xi32, #tpu.memory_space<vmem>>, vector<1x1x128xi32>
    %432 = vector.shape_cast %431 : vector<1x1x128xi32> to vector<1x128xi32>
    %433 = vector.shape_cast %430 : vector<1x128xi32> to vector<1x1x128xi32>
    tpu.vector_store %arg4[%c0_185, %c0_186, %c0_187], %433 {strides = array<i32>} : memref<1x1x128xi32, #tpu.memory_space<vmem>>, vector<1x1x128xi32>,
    return
  }
  func.func @transform_0(%arg0: i32, %arg1: memref<2xi32, #tpu.memory_space<smem>>) -> (i32, i32, i32, i32) {
    %c0_i32 = arith.constant 0 : i32
    %c0_i32_0 = arith.constant 0 : i32
    %c0_i32_1 = arith.constant 0 : i32
    %c0_i32_2 = arith.constant 0 : i32
    return %arg0, %c0_i32, %c0_i32_0, %c0_i32_1 : i32, i32, i32, i32
  }
  func.func @transform_1(%arg0: i32, %arg1: memref<2xi32, #tpu.memory_space<smem>>) -> (i32, i32) {
    %c0_i32 = arith.constant 0 : i32
    %c0_i32_0 = arith.constant 0 : i32
    %c0_i32_1 = arith.constant 0 : i32
    return %c0_i32, %c0_i32_0 : i32, i32
  }
  func.func @transform_2(%arg0: i32, %arg1: memref<2xi32, #tpu.memory_space<smem>>) -> (i32, i32, i32) {
    %c0_i32 = arith.constant 0 : i32
    %c0_i32_0 = arith.constant 0 : i32
    %c0_i32_1 = arith.constant 0 : i32
    return %arg0, %c0_i32, %c0_i32_0 : i32, i32, i32
  }
}

</mosaic_0001>

<llo_original>
// kernel: tpu_custom_call.1
$region0: #{tpu_custom_call.1}
  #allocation0 [shape = 'u32[]', space=smem, size = 0x4, offset = 0x4, fixed_abs, tag = 'smem constant byte address 0x4 - core index']
  #allocation1 [shape = 'u32[144,128]{1,0:T(1,128)}', space=vmem, size = 0x12000, scoped, tag = 'internal scratch']
  #allocation2 [shape = 'f32[8,16]{1,0:T(8,128)}', space=vmem, size = 0x1000, scoped, tag = 'scratch operand']
  #allocation3 [shape = 's32[8]{0:T(128)}', space=smem, size = 0x200, scoped, tag = 'scratch operand']
  #allocation4 [shape = 's32[1]{0}', space=sflag, size = 0x4, scoped, tag = 'scoped memory for tpu_custom_call.1']
  #allocation5 [shape = 'u8[512]{0}', space=smem, size = 0x200, scoped, tag = 'prefetched SMEM operand 0']
  %s0 = inlined_call_operand.hbm [shape: s32[2], index: 0, kind: input, shape index: {}]
  %s1 = inlined_call_operand.hbm [shape: f32[2,3,8,16], index: 1, kind: input, shape index: {}]
  %s2 = inlined_call_operand.vmem [shape: f32[2,384], index: 2, kind: input, shape index: {}]
  %s3 = inlined_call_operand.hbm [shape: s32[2,1,128], index: 3, kind: output, shape index: {}]
  %s4 = sld [smem:[#allocation0]]
  $region49: #{tpu_custom_call.1} parent=0
    _
  %s6 = ssub.s32 1, %s4
  %s7 = scalar_select 0, %s6, %s4
  %9 = dma.hbm_to_smem %s0, 16, [#allocation5], [#allocation4]
  %10 = dma.done [#allocation4], 16
  %11 = sfence
  $region1: #{tpu_custom_call.1} parent=0
    #allocation6 [shape = 'u8[24576]{0}', space=vmem, size = 0x6000, scoped, tag = 'input window, operand 1']
    #allocation7 [shape = 's32[2]{0}', space=sflag, size = 0x8, scoped, tag = 'scoped memory for tpu_custom_call.1']
    #allocation8 [shape = 's32[2]{0}', space=sflag, size = 0x8, scoped, tag = 'scoped memory for tpu_custom_call.1']
    #allocation9 [shape = 's32[2]{0}', space=sflag, size = 0x8, scoped, tag = 'scoped memory for tpu_custom_call.1']
    #allocation10 [shape = 'u8[3072]{0}', space=smem, size = 0xc00, scoped, tag = 'input window, operand 2, single buffered']
    #allocation11 [shape = 'u8[1024]{0}', space=vmem, size = 0x400, scoped, tag = 'output window, operand 0']
    %12 = vsyncpa [#allocation7], 0
    %s13 = scalar_lea.sflag [#allocation7], 1
    %14 = vsyncpa %s13, 0
    %15 = vsyncpa [#allocation9], 0
    %16 = vsyncpa [#allocation8], 0
    %s17 = scalar_lea.sflag [#allocation8], 1
    %18 = vsyncpa %s17, 0
    loop: start=0, step=1, limit=4
    $region2: #{tpu_custom_call.1} parent=1 // loop_pre_header
      _
    $region3: #{tpu_custom_call.1} parent=1 // loop_header
      %s20 = sphi 0, %s24
      %p21 = scmp.ge.s32.totalorder %s20, 4
      %s30 = sphi 0, %s32
      %s33 = sphi 0, %s30
      %s34 = sphi 0, %s33
      %s50 = sphi 0, %s34
      %s54 = sphi 0, %s54
      %s56 = sphi 0, %s54
      %s57 = sphi 0, %s56
      %s71 = sphi 0, %s57
      %s77 = sphi 0, %s79
      %s80 = sphi 0, %s77
      %s81 = sphi 0, %s80
      %s97 = sphi 0, %s81
    $region4: #{tpu_custom_call.1} parent=1 // loop_header_branch
      %23 = sbr.rel (%p21) target = $region8
    $region5: #{tpu_custom_call.1} parent=1 // loop_body
      %s25 = ssub.s32 %s20, 1
      %s26 = ssub.s32 %s20, 2
      %s27 = sadd.s32 %s20, 1
      %s28 = ssub.s32 %s20, %s27
      %p29 = scmp.eq.s32.totalorder %s28, 0
      %s31 = sadd.s32 %s30, 1
      %s32 = scalar_select %p29, %s30, %s31
      %p35 = pneg %p29
      %p36 = scmp.eq.s32.totalorder %s20, 1
      %p37 = por %p35, %p36
      %p38 = scmp.ne.s32.totalorder %s30, %s33
      %p39 = scmp.eq.s32.totalorder %s20, 0
      %p40 = por %p38, %p39
      %p41 = scmp.ne.s32.totalorder %s30, %s33
      %p42 = scmp.eq.s32.totalorder %s25, 1
      %p43 = por %p41, %p42
      %p44 = scmp.ne.s32.totalorder %s33, %s34
      %p45 = scmp.eq.s32.totalorder %s25, 0
      %p46 = por %p44, %p45
      %p47 = scmp.ne.s32.totalorder %s33, %s34
      %p48 = scmp.eq.s32.totalorder %s26, 1
      %p49 = por %p47, %p48
      %p51 = scmp.ne.s32.totalorder %s34, %s50
      %p52 = scmp.eq.s32.totalorder %s26, 0
      %p53 = por %p51, %p52
      %s55 = sadd.s32 %s54, 1
      %p58 = scmp.eq.s32.totalorder %s20, 1
      %p59 = scmp.ne.s32.totalorder %s54, %s56
      %p60 = scmp.eq.s32.totalorder %s20, 0
      %p61 = por %p59, %p60
      %p62 = scmp.ne.s32.totalorder %s54, %s56
      %p63 = scmp.eq.s32.totalorder %s25, 1
      %p64 = por %p62, %p63
      %p65 = scmp.ne.s32.totalorder %s56, %s57
      %p66 = scmp.eq.s32.totalorder %s25, 0
      %p67 = por %p65, %p66
      %p68 = scmp.ne.s32.totalorder %s56, %s57
      %p69 = scmp.eq.s32.totalorder %s26, 1
      %p70 = por %p68, %p69
      %p72 = scmp.ne.s32.totalorder %s57, %s71
      %p73 = scmp.eq.s32.totalorder %s26, 0
      %p74 = por %p72, %p73
      %s75 = ssub.s32 %s20, %s27
      %p76 = scmp.eq.s32.totalorder %s75, 0
      %s78 = sadd.s32 %s77, 1
      %s79 = scalar_select %p76, %s77, %s78
      %p82 = pneg %p76
      %p83 = scmp.eq.s32.totalorder %s20, 1
      %p84 = por %p82, %p83
      %p85 = scmp.ne.s32.totalorder %s77, %s80
      %p86 = scmp.eq.s32.totalorder %s20, 0
      %p87 = por %p85, %p86
      %p88 = scmp.ne.s32.totalorder %s77, %s80
      %p89 = scmp.eq.s32.totalorder %s25, 1
      %p90 = por %p88, %p89
      %p91 = scmp.ne.s32.totalorder %s80, %s81
      %p92 = scmp.eq.s32.totalorder %s25, 0
      %p93 = por %p91, %p92
      %p94 = scmp.ne.s32.totalorder %s80, %s81
      %p95 = scmp.eq.s32.totalorder %s26, 1
      %p96 = por %p94, %p95
      %p98 = scmp.ne.s32.totalorder %s81, %s97
      %p99 = scmp.eq.s32.totalorder %s26, 0
      %p100 = por %p98, %p99
      %p101 = scmp.le.s32.totalorder 1, %s20
      %p102 = scmp.lt.s32.totalorder %s20, 3
      %p103 = pnand %p101, %p102
      %p104 = pneg %p103
      // Predicated region
      $region9: #{tpu_custom_call.1} parent=5 // pred_check
        _
      $region10: #{tpu_custom_call.1} parent=5 // pred_check_branch
        %106 = sbr.rel (%p103) target = $region12
      $region11: #{tpu_custom_call.1} parent=5 // pred_region
        %s107 = ssub.s32 %s20, 1
        // Predicated region
        $region13: #{tpu_custom_call.1} parent=11 // pred_check
          %p108 = pneg %p67
        $region14: #{tpu_custom_call.1} parent=11 // pred_check_branch
          %110 = sbr.rel (%p108) target = $region16
        $region15: #{tpu_custom_call.1} parent=11 // pred_region
          %s112 = ssub.s32 96, 96
          %113 = vsyncadd [#allocation9], %s112
          %s115 = sshll.u32 %s2, 4
          %s116 = int_to_ptr.vmem [resolvable:$true] %s115
          %118 = dma.vmem_to_smem %s116, 96, [#allocation10], [#allocation9]
        $region16: #{tpu_custom_call.1} parent=11 // pred_fallthru
          _
      $region12: #{tpu_custom_call.1} parent=5 // pred_fallthru
        _
      %p119 = scmp.lt.s32.totalorder %s20, 2
      // Predicated region
      $region17: #{tpu_custom_call.1} parent=5 // pred_check
        %p120 = pneg %p119
      $region18: #{tpu_custom_call.1} parent=5 // pred_check_branch
        %122 = sbr.rel (%p120) target = $region20
      $region19: #{tpu_custom_call.1} parent=5 // pred_region
        // Predicated region
        $region21: #{tpu_custom_call.1} parent=19 // pred_check
          %p123 = pneg %p40
        $region22: #{tpu_custom_call.1} parent=19 // pred_check_branch
          %125 = sbr.rel (%p123) target = $region24
        $region23: #{tpu_custom_call.1} parent=19 // pred_region
          %s126 = sand.u32 %s30, 1
          %s127 = scalar_lea.sflag [#allocation7], %s126
          %s128 = sand.u32 %s30, 1
          %s129 = smul.addr %s128, 24
          %s130 = scalar_lea.vmem [#allocation6], %s129
          %s132 = ssub.s32 384, 384
          %133 = vsyncadd %s127, %s132
          %s134 = smul.addr %s20, 3
          %s135 = smul.addr %s134, 128
          %s136 = scalar_lea.hbm %s1, %s135
          %s137 = sshll.u32 %s130, 4
          %s138 = int_to_ptr.vmem [resolvable:$true] %s137
          %143 = dma.hbm_to_vmem [thread:$0]  %s136, 384, %s138, %s127, 128, 128, 8
        $region24: #{tpu_custom_call.1} parent=19 // pred_fallthru
          _
      $region20: #{tpu_custom_call.1} parent=5 // pred_fallthru
        _
      %p144 = scmp.le.s32.totalorder 1, %s20
      %p145 = scmp.lt.s32.totalorder %s20, 3
      %p146 = pnand %p144, %p145
      %p147 = pneg %p146
      // Predicated region
      $region25: #{tpu_custom_call.1} parent=5 // pred_check
        _
      $region26: #{tpu_custom_call.1} parent=5 // pred_check_branch
        %149 = sbr.rel (%p146) target = $region28
      $region27: #{tpu_custom_call.1} parent=5 // pred_region
        %s150 = ssub.s32 %s20, 1
        %s151 = sand.u32 %s33, 1
        %s152 = scalar_lea.sflag [#allocation7], %s151
        %s153 = sand.u32 %s33, 1
        %s154 = smul.addr %s153, 24
        %s155 = scalar_lea.vmem [#allocation6], %s154
        // Predicated region
        $region29: #{tpu_custom_call.1} parent=27 // pred_check
          %p156 = pneg %p46
        $region30: #{tpu_custom_call.1} parent=27 // pred_check_branch
          %158 = sbr.rel (%p156) target = $region32
        $region31: #{tpu_custom_call.1} parent=27 // pred_region
          %159 = dma.done %s152, 384
        $region32: #{tpu_custom_call.1} parent=27 // pred_fallthru
          _
        // Predicated region
        $region33: #{tpu_custom_call.1} parent=27 // pred_check
          %p160 = pneg %p67
        $region34: #{tpu_custom_call.1} parent=27 // pred_check_branch
          %162 = sbr.rel (%p160) target = $region36
        $region35: #{tpu_custom_call.1} parent=27 // pred_region
          %163 = dma.done [#allocation9], 96
        $region36: #{tpu_custom_call.1} parent=27 // pred_fallthru
          _
        %164 = sfence
        %s165 = sand.u32 %s33, 1
        %s166 = scalar_lea.sflag [#allocation7], %s165
        %s167 = sand.u32 %s33, 1
        %s168 = smul.addr %s167, 24
        %s169 = scalar_lea.vmem [#allocation6], %s168
        %p170 = pneg %p46
        %p171 = pneg %p43
        %p172 = pneg %p67
        %p173 = pneg %p64
        %p174 = pneg %p93
        %p175 = pneg %p90
        %s176 = sand.u32 %s80, 1
        %s177 = scalar_lea.sflag [#allocation8], %s176
        %s178 = sand.u32 %s80, 1
        %s179 = scalar_lea.vmem [#allocation11], %s178
        %v180 = vlaneseq
        %v181 = vshrl.u32 %v180, 7
        %v182 = vmul.u32 %v181, 16
        %v183 = vlaneseq
        %v184 = vand.u32 %v183, 127
        %v185 = vadd.s32 %v182, %v184
        %vm186 = vcmp.lt.s32.totalorder %v185, 128
        %v187 = vsel %vm186, 1e+10, -1.0
        %vm188 = vcmask 130048
        %189 = vst.msk [vmem:[#allocation2] sm:$0xff] %vm188, %v187
        %s190 = sld [smem:[#allocation5 + %s25]]
        %s191 = scalar_lea.smem [#allocation3], 0
        %192 = sst [smem:[%s191]] %s190
        %s193 = sshra.s32 %s190, 7
        %s194 = sand.u32 %s190, 127
        %s195 = sshra.s32 %s25, 1
        %s196 = sand.u32 %s25, 1
        %s197 = smul.u32 %s195, 3
        %s198 = sadd.s32 %s193, %s197
        %s199 = smul.u32 %s198, 256
        %s200 = sshra.s32 %s25, 1
        %s201 = sand.u32 %s25, 1
        %s202 = sshra.s32 %s190, 7
        %s203 = sand.u32 %s190, 127
        %s204 = smul.u32 %s201, 128
        %s205 = sadd.s32 %s204, %s203
        %s206 = sadd.s32 %s199, %s205
        %s207 = sld [smem:[#allocation10 + %s206]]
        %v208 = vld [vmem:[%s155] sm:$0xff]
        %v209 = vstv %s207
        %v210 = vsub.f32 %v208, %v209
        %v211 = vmul.f32 %v210, %v210
        %s212 = sadd.s32 %s190, 128
        %s213 = sshra.s32 %s212, 7
        %s214 = sand.u32 %s212, 127
        %s215 = sadd.s32 %s213, %s197
        %s216 = smul.u32 %s215, 256
        %s217 = sshra.s32 %s212, 7
        %s218 = sand.u32 %s212, 127
        %s219 = sadd.s32 %s204, %s218
        %s220 = sadd.s32 %s216, %s219
        %s221 = sld [smem:[#allocation10 + %s220]]
        %s222 = scalar_lea.vmem %s155, 8 [#allocation6]
        %v223 = vld [vmem:[%s222] sm:$0xff]
        %v224 = vstv %s221
        %v225 = vsub.f32 %v223, %v224
        %v226 = vmul.f32 %v225, %v225
        %v227 = vadd.f32 %v211, %v226
        %s228 = sadd.s32 %s190, 256
        %s229 = sshra.s32 %s228, 7
        %s230 = sand.u32 %s228, 127
        %s231 = sadd.s32 %s229, %s197
        %s232 = smul.u32 %s231, 256
        %s233 = sshra.s32 %s228, 7
        %s234 = sand.u32 %s228, 127
        %s235 = sadd.s32 %s204, %s234
        %s236 = sadd.s32 %s232, %s235
        %s237 = sld [smem:[#allocation10 + %s236]]
        %s238 = scalar_lea.vmem %s155, 16 [#allocation6]
        %v239 = vld [vmem:[%s238] sm:$0xff]
        %v240 = vstv %s237
        %v241 = vsub.f32 %v239, %v240
        %v242 = vmul.f32 %v241, %v241
        %v243 = vadd.f32 %v227, %v242
        %v244 = vld [vmem:[#allocation2] sm:$0xff]
        %v245 = vmin.f32 %v244, %v243
        %246 = vst.msk [vmem:[#allocation2] sm:$0xff] %vm188, %v245
        %v247 = vsel %vm188, %v245, -inf
        %248 = vmax.xlane.f32.xlu0 %v247
        %v249 = vpop.xlane.xlu0 %248
        %v250 = vrot.slane %v249, 4
        %v251 = vmax.f32 %v249, %v250
        %v252 = vrot.slane %v251, 2
        %v253 = vmax.f32 %v251, %v252
        %v254 = vrot.slane %v253, 1
        %v255 = vmax.f32 %v253, %v254
        %s256 = vtos %v255
        %v257 = vstv %s256
        %vm258 = vcmp.eq.f32.partialorder %v245, %v257
        %v259 = vsel %vm258, %v185, 128
        %v260 = vsel %vm188, %v259, 2147483647
        %v261 = vand.u32 %v260, 65535
        %v262 = vshra.s32 %v260, 16
        %v263 = vcvt.s32.f32 %v261
        %v264 = vcvt.s32.f32 %v262
        %265 = vmin.xlane.f32.xlu0 %v264
        %v266 = vpop.xlane.xlu0 %265
        %vm267 = vcmp.eq.f32.partialorder %v264, %v266
        %v268 = vsel %vm267, %v263, inf
        %269 = vmin.xlane.f32.xlu0 %v268
        %v270 = vpop.xlane.xlu0 %269
        %v271 = vcvt.f32.s32 %v270
        %v272 = vcvt.f32.s32 %v266
        %v273 = vshll.u32 %v272, 16
        %v274 = vadd.s32 %v273, %v271
        %v275 = vrot.slane %v274, 4
        %vm276 = vcmp.lt.s32.totalorder %v274, %v275
        %v277 = vsel %vm276, %v274, %v275
        %v278 = vrot.slane %v277, 2
        %vm279 = vcmp.lt.s32.totalorder %v277, %v278
        %v280 = vsel %vm279, %v277, %v278
        %v281 = vrot.slane %v280, 1
        %vm282 = vcmp.lt.s32.totalorder %v280, %v281
        %v283 = vsel %vm282, %v280, %v281
        %s284 = vtos %v283
        %s285 = scalar_lea.smem [#allocation3], 1
        %286 = sst [smem:[%s285]] %s284
        %s287 = sshra.s32 %s284, 7
        %s288 = sand.u32 %s284, 127
        %s289 = sadd.s32 %s287, %s197
        %s290 = smul.u32 %s289, 256
        %s291 = sshra.s32 %s284, 7
        %s292 = sand.u32 %s284, 127
        %s293 = sadd.s32 %s204, %s292
        %s294 = sadd.s32 %s290, %s293
        %s295 = sld [smem:[#allocation10 + %s294]]
        %v296 = vld [vmem:[%s155] sm:$0xff]
        %v297 = vstv %s295
        %v298 = vsub.f32 %v296, %v297
        %v299 = vmul.f32 %v298, %v298
        %s300 = sadd.s32 %s284, 128
        %s301 = sshra.s32 %s300, 7
        %s302 = sand.u32 %s300, 127
        %s303 = sadd.s32 %s301, %s197
        %s304 = smul.u32 %s303, 256
        %s305 = sshra.s32 %s300, 7
        %s306 = sand.u32 %s300, 127
        %s307 = sadd.s32 %s204, %s306
        %s308 = sadd.s32 %s304, %s307
        %s309 = sld [smem:[#allocation10 + %s308]]
        %v310 = vld [vmem:[%s222] sm:$0xff]
        %v311 = vstv %s309
        %v312 = vsub.f32 %v310, %v311
        %v313 = vmul.f32 %v312, %v312
        %v314 = vadd.f32 %v299, %v313
        %s315 = sadd.s32 %s284, 256
        %s316 = sshra.s32 %s315, 7
        %s317 = sand.u32 %s315, 127
        %s318 = sadd.s32 %s316, %s197
        %s319 = smul.u32 %s318, 256
        %s320 = sshra.s32 %s315, 7
        %s321 = sand.u32 %s315, 127
        %s322 = sadd.s32 %s204, %s321
        %s323 = sadd.s32 %s319, %s322
        %s324 = sld [smem:[#allocation10 + %s323]]
        %v325 = vld [vmem:[%s238] sm:$0xff]
        %v326 = vstv %s324
        %v327 = vsub.f32 %v325, %v326
        %v328 = vmul.f32 %v327, %v327
        %v329 = vadd.f32 %v314, %v328
        %v330 = vld [vmem:[#allocation2] sm:$0xff]
        %v331 = vmin.f32 %v330, %v329
        %332 = vst.msk [vmem:[#allocation2] sm:$0xff] %vm188, %v331
        %v333 = vsel %vm188, %v331, -inf
        %334 = vmax.xlane.f32.xlu0 %v333
        %v335 = vpop.xlane.xlu0 %334
        %v336 = vrot.slane %v335, 4
        %v337 = vmax.f32 %v335, %v336
        %v338 = vrot.slane %v337, 2
        %v339 = vmax.f32 %v337, %v338
        %v340 = vrot.slane %v339, 1
        %v341 = vmax.f32 %v339, %v340
        %s342 = vtos %v341
        %v343 = vstv %s342
        %vm344 = vcmp.eq.f32.partialorder %v331, %v343
        %v345 = vsel %vm344, %v185, 128
        %v346 = vsel %vm188, %v345, 2147483647
        %v347 = vand.u32 %v346, 65535
        %v348 = vshra.s32 %v346, 16
        %v349 = vcvt.s32.f32 %v347
        %v350 = vcvt.s32.f32 %v348
        %351 = vmin.xlane.f32.xlu0 %v350
        %v352 = vpop.xlane.xlu0 %351
        %vm353 = vcmp.eq.f32.partialorder %v350, %v352
        %v354 = vsel %vm353, %v349, inf
        %355 = vmin.xlane.f32.xlu0 %v354
        %v356 = vpop.xlane.xlu0 %355
        %v357 = vcvt.f32.s32 %v356
        %v358 = vcvt.f32.s32 %v352
        %v359 = vshll.u32 %v358, 16
        %v360 = vadd.s32 %v359, %v357
        %v361 = vrot.slane %v360, 4
        %vm362 = vcmp.lt.s32.totalorder %v360, %v361
        %v363 = vsel %vm362, %v360, %v361
        %v364 = vrot.slane %v363, 2
        %vm365 = vcmp.lt.s32.totalorder %v363, %v364
        %v366 = vsel %vm365, %v363, %v364
        %v367 = vrot.slane %v366, 1
        %vm368 = vcmp.lt.s32.totalorder %v366, %v367
        %v369 = vsel %vm368, %v366, %v367
        %s370 = vtos %v369
        %s371 = scalar_lea.smem [#allocation3], 2
        %372 = sst [smem:[%s371]] %s370
        %s373 = sshra.s32 %s370, 7
        %s374 = sand.u32 %s370, 127
        %s375 = sadd.s32 %s373, %s197
        %s376 = smul.u32 %s375, 256
        %s377 = sshra.s32 %s370, 7
        %s378 = sand.u32 %s370, 127
        %s379 = sadd.s32 %s204, %s378
        %s380 = sadd.s32 %s376, %s379
        %s381 = sld [smem:[#allocation10 + %s380]]
        %v382 = vld [vmem:[%s155] sm:$0xff]
        %v383 = vstv %s381
        %v384 = vsub.f32 %v382, %v383
        %v385 = vmul.f32 %v384, %v384
        %s386 = sadd.s32 %s370, 128
        %s387 = sshra.s32 %s386, 7
        %s388 = sand.u32 %s386, 127
        %s389 = sadd.s32 %s387, %s197
        %s390 = smul.u32 %s389, 256
        %s391 = sshra.s32 %s386, 7
        %s392 = sand.u32 %s386, 127
        %s393 = sadd.s32 %s204, %s392
        %s394 = sadd.s32 %s390, %s393
        %s395 = sld [smem:[#allocation10 + %s394]]
        %v396 = vld [vmem:[%s222] sm:$0xff]
        %v397 = vstv %s395
        %v398 = vsub.f32 %v396, %v397
        %v399 = vmul.f32 %v398, %v398
        %v400 = vadd.f32 %v385, %v399
        %s401 = sadd.s32 %s370, 256
        %s402 = sshra.s32 %s401, 7
        %s403 = sand.u32 %s401, 127
        %s404 = sadd.s32 %s402, %s197
        %s405 = smul.u32 %s404, 256
        %s406 = sshra.s32 %s401, 7
        %s407 = sand.u32 %s401, 127
        %s408 = sadd.s32 %s204, %s407
        %s409 = sadd.s32 %s405, %s408
        %s410 = sld [smem:[#allocation10 + %s409]]
        %v411 = vld [vmem:[%s238] sm:$0xff]
        %v412 = vstv %s410
        %v413 = vsub.f32 %v411, %v412
        %v414 = vmul.f32 %v413, %v413
        %v415 = vadd.f32 %v400, %v414
        %v416 = vld [vmem:[#allocation2] sm:$0xff]
        %v417 = vmin.f32 %v416, %v415
        %418 = vst.msk [vmem:[#allocation2] sm:$0xff] %vm188, %v417
        %v419 = vsel %vm188, %v417, -inf
        %420 = vmax.xlane.f32.xlu0 %v419
        %v421 = vpop.xlane.xlu0 %420
        %v422 = vrot.slane %v421, 4
        %v423 = vmax.f32 %v421, %v422
        %v424 = vrot.slane %v423, 2
        %v425 = vmax.f32 %v423, %v424
        %v426 = vrot.slane %v425, 1
        %v427 = vmax.f32 %v425, %v426
        %s428 = vtos %v427
        %v429 = vstv %s428
        %vm430 = vcmp.eq.f32.partialorder %v417, %v429
        %v431 = vsel %vm430, %v185, 128
        %v432 = vsel %vm188, %v431, 2147483647
        %v433 = vand.u32 %v432, 65535
        %v434 = vshra.s32 %v432, 16
        %v435 = vcvt.s32.f32 %v433
        %v436 = vcvt.s32.f32 %v434
        %437 = vmin.xlane.f32.xlu0 %v436
        %v438 = vpop.xlane.xlu0 %437
        %vm439 = vcmp.eq.f32.partialorder %v436, %v438
        %v440 = vsel %vm439, %v435, inf
        %441 = vmin.xlane.f32.xlu0 %v440
        %v442 = vpop.xlane.xlu0 %441
        %v443 = vcvt.f32.s32 %v442
        %v444 = vcvt.f32.s32 %v438
        %v445 = vshll.u32 %v444, 16
        %v446 = vadd.s32 %v445, %v443
        %v447 = vrot.slane %v446, 4
        %vm448 = vcmp.lt.s32.totalorder %v446, %v447
        %v449 = vsel %vm448, %v446, %v447
        %v450 = vrot.slane %v449, 2
        %vm451 = vcmp.lt.s32.totalorder %v449, %v450
        %v452 = vsel %vm451, %v449, %v450
        %v453 = vrot.slane %v452, 1
        %vm454 = vcmp.lt.s32.totalorder %v452, %v453
        %v455 = vsel %vm454, %v452, %v453
        %s456 = vtos %v455
        %s457 = scalar_lea.smem [#allocation3], 3
        %458 = sst [smem:[%s457]] %s456
        %s459 = sshra.s32 %s456, 7
        %s460 = sand.u32 %s456, 127
        %s461 = sadd.s32 %s459, %s197
        %s462 = smul.u32 %s461, 256
        %s463 = sshra.s32 %s456, 7
        %s464 = sand.u32 %s456, 127
        %s465 = sadd.s32 %s204, %s464
        %s466 = sadd.s32 %s462, %s465
        %s467 = sld [smem:[#allocation10 + %s466]]
        %v468 = vld [vmem:[%s155] sm:$0xff]
        %v469 = vstv %s467
        %v470 = vsub.f32 %v468, %v469
        %v471 = vmul.f32 %v470, %v470
        %s472 = sadd.s32 %s456, 128
        %s473 = sshra.s32 %s472, 7
        %s474 = sand.u32 %s472, 127
        %s475 = sadd.s32 %s473, %s197
        %s476 = smul.u32 %s475, 256
        %s477 = sshra.s32 %s472, 7
        %s478 = sand.u32 %s472, 127
        %s479 = sadd.s32 %s204, %s478
        %s480 = sadd.s32 %s476, %s479
        %s481 = sld [smem:[#allocation10 + %s480]]
        %v482 = vld [vmem:[%s222] sm:$0xff]
        %v483 = vstv %s481
        %v484 = vsub.f32 %v482, %v483
        %v485 = vmul.f32 %v484, %v484
        %v486 = vadd.f32 %v471, %v485
        %s487 = sadd.s32 %s456, 256
        %s488 = sshra.s32 %s487, 7
        %s489 = sand.u32 %s487, 127
        %s490 = sadd.s32 %s488, %s197
        %s491 = smul.u32 %s490, 256
        %s492 = sshra.s32 %s487, 7
        %s493 = sand.u32 %s487, 127
        %s494 = sadd.s32 %s204, %s493
        %s495 = sadd.s32 %s491, %s494
        %s496 = sld [smem:[#allocation10 + %s495]]
        %v497 = vld [vmem:[%s238] sm:$0xff]
        %v498 = vstv %s496
        %v499 = vsub.f32 %v497, %v498
        %v500 = vmul.f32 %v499, %v499
        %v501 = vadd.f32 %v486, %v500
        %v502 = vld [vmem:[#allocation2] sm:$0xff]
        %v503 = vmin.f32 %v502, %v501
        %504 = vst.msk [vmem:[#allocation2] sm:$0xff] %vm188, %v503
        %v505 = vsel %vm188, %v503, -inf
        %506 = vmax.xlane.f32.xlu0 %v505
        %v507 = vpop.xlane.xlu0 %506
        %v508 = vrot.slane %v507, 4
        %v509 = vmax.f32 %v507, %v508
        %v510 = vrot.slane %v509, 2
        %v511 = vmax.f32 %v509, %v510
        %v512 = vrot.slane %v511, 1
        %v513 = vmax.f32 %v511, %v512
        %s514 = vtos %v513
        %v515 = vstv %s514
        %vm516 = vcmp.eq.f32.partialorder %v503, %v515
        %v517 = vsel %vm516, %v185, 128
        %v518 = vsel %vm188, %v517, 2147483647
        %v519 = vand.u32 %v518, 65535
        %v520 = vshra.s32 %v518, 16
        %v521 = vcvt.s32.f32 %v519
        %v522 = vcvt.s32.f32 %v520
        %523 = vmin.xlane.f32.xlu0 %v522
        %v524 = vpop.xlane.xlu0 %523
        %vm525 = vcmp.eq.f32.partialorder %v522, %v524
        %v526 = vsel %vm525, %v521, inf
        %527 = vmin.xlane.f32.xlu0 %v526
        %v528 = vpop.xlane.xlu0 %527
        %v529 = vcvt.f32.s32 %v528
        %v530 = vcvt.f32.s32 %v524
        %v531 = vshll.u32 %v530, 16
        %v532 = vadd.s32 %v531, %v529
        %v533 = vrot.slane %v532, 4
        %vm534 = vcmp.lt.s32.totalorder %v532, %v533
        %v535 = vsel %vm534, %v532, %v533
        %v536 = vrot.slane %v535, 2
        %vm537 = vcmp.lt.s32.totalorder %v535, %v536
        %v538 = vsel %vm537, %v535, %v536
        %v539 = vrot.slane %v538, 1
        %vm540 = vcmp.lt.s32.totalorder %v538, %v539
        %v541 = vsel %vm540, %v538, %v539
        %s542 = vtos %v541
        %s543 = scalar_lea.smem [#allocation3], 4
        %544 = sst [smem:[%s543]] %s542
        %s545 = sshra.s32 %s542, 7
        %s546 = sand.u32 %s542, 127
        %s547 = sadd.s32 %s545, %s197
        %s548 = smul.u32 %s547, 256
        %s549 = sshra.s32 %s542, 7
        %s550 = sand.u32 %s542, 127
        %s551 = sadd.s32 %s204, %s550
        %s552 = sadd.s32 %s548, %s551
        %s553 = sld [smem:[#allocation10 + %s552]]
        %v554 = vld [vmem:[%s155] sm:$0xff]
        %v555 = vstv %s553
        %v556 = vsub.f32 %v554, %v555
        %v557 = vmul.f32 %v556, %v556
        %s558 = sadd.s32 %s542, 128
        %s559 = sshra.s32 %s558, 7
        %s560 = sand.u32 %s558, 127
        %s561 = sadd.s32 %s559, %s197
        %s562 = smul.u32 %s561, 256
        %s563 = sshra.s32 %s558, 7
        %s564 = sand.u32 %s558, 127
        %s565 = sadd.s32 %s204, %s564
        %s566 = sadd.s32 %s562, %s565
        %s567 = sld [smem:[#allocation10 + %s566]]
        %v568 = vld [vmem:[%s222] sm:$0xff]
        %v569 = vstv %s567
        %v570 = vsub.f32 %v568, %v569
        %v571 = vmul.f32 %v570, %v570
        %v572 = vadd.f32 %v557, %v571
        %s573 = sadd.s32 %s542, 256
        %s574 = sshra.s32 %s573, 7
        %s575 = sand.u32 %s573, 127
        %s576 = sadd.s32 %s574, %s197
        %s577 = smul.u32 %s576, 256
        %s578 = sshra.s32 %s573, 7
        %s579 = sand.u32 %s573, 127
        %s580 = sadd.s32 %s204, %s579
        %s581 = sadd.s32 %s577, %s580
        %s582 = sld [smem:[#allocation10 + %s581]]
        %v583 = vld [vmem:[%s238] sm:$0xff]
        %v584 = vstv %s582
        %v585 = vsub.f32 %v583, %v584
        %v586 = vmul.f32 %v585, %v585
        %v587 = vadd.f32 %v572, %v586
        %v588 = vld [vmem:[#allocation2] sm:$0xff]
        %v589 = vmin.f32 %v588, %v587
        %590 = vst.msk [vmem:[#allocation2] sm:$0xff] %vm188, %v589
        %v591 = vsel %vm188, %v589, -inf
        %592 = vmax.xlane.f32.xlu0 %v591
        %v593 = vpop.xlane.xlu0 %592
        %v594 = vrot.slane %v593, 4
        %v595 = vmax.f32 %v593, %v594
        %v596 = vrot.slane %v595, 2
        %v597 = vmax.f32 %v595, %v596
        %v598 = vrot.slane %v597, 1
        %v599 = vmax.f32 %v597, %v598
        %s600 = vtos %v599
        %v601 = vstv %s600
        %vm602 = vcmp.eq.f32.partialorder %v589, %v601
        %v603 = vsel %vm602, %v185, 128
        %v604 = vsel %vm188, %v603, 2147483647
        %v605 = vand.u32 %v604, 65535
        %v606 = vshra.s32 %v604, 16
        %v607 = vcvt.s32.f32 %v605
        %v608 = vcvt.s32.f32 %v606
        %609 = vmin.xlane.f32.xlu0 %v608
        %v610 = vpop.xlane.xlu0 %609
        %vm611 = vcmp.eq.f32.partialorder %v608, %v610
        %v612 = vsel %vm611, %v607, inf
        %613 = vmin.xlane.f32.xlu0 %v612
        %v614 = vpop.xlane.xlu0 %613
        %v615 = vcvt.f32.s32 %v614
        %v616 = vcvt.f32.s32 %v610
        %v617 = vshll.u32 %v616, 16
        %v618 = vadd.s32 %v617, %v615
        %v619 = vrot.slane %v618, 4
        %vm620 = vcmp.lt.s32.totalorder %v618, %v619
        %v621 = vsel %vm620, %v618, %v619
        %v622 = vrot.slane %v621, 2
        %vm623 = vcmp.lt.s32.totalorder %v621, %v622
        %v624 = vsel %vm623, %v621, %v622
        %v625 = vrot.slane %v624, 1
        %vm626 = vcmp.lt.s32.totalorder %v624, %v625
        %v627 = vsel %vm626, %v624, %v625
        %s628 = vtos %v627
        %s629 = scalar_lea.smem [#allocation3], 5
        %630 = sst [smem:[%s629]] %s628
        %s631 = sshra.s32 %s628, 7
        %s632 = sand.u32 %s628, 127
        %s633 = sadd.s32 %s631, %s197
        %s634 = smul.u32 %s633, 256
        %s635 = sshra.s32 %s628, 7
        %s636 = sand.u32 %s628, 127
        %s637 = sadd.s32 %s204, %s636
        %s638 = sadd.s32 %s634, %s637
        %s639 = sld [smem:[#allocation10 + %s638]]
        %v640 = vld [vmem:[%s155] sm:$0xff]
        %v641 = vstv %s639
        %v642 = vsub.f32 %v640, %v641
        %v643 = vmul.f32 %v642, %v642
        %s644 = sadd.s32 %s628, 128
        %s645 = sshra.s32 %s644, 7
        %s646 = sand.u32 %s644, 127
        %s647 = sadd.s32 %s645, %s197
        %s648 = smul.u32 %s647, 256
        %s649 = sshra.s32 %s644, 7
        %s650 = sand.u32 %s644, 127
        %s651 = sadd.s32 %s204, %s650
        %s652 = sadd.s32 %s648, %s651
        %s653 = sld [smem:[#allocation10 + %s652]]
        %v654 = vld [vmem:[%s222] sm:$0xff]
        %v655 = vstv %s653
        %v656 = vsub.f32 %v654, %v655
        %v657 = vmul.f32 %v656, %v656
        %v658 = vadd.f32 %v643, %v657
        %s659 = sadd.s32 %s628, 256
        %s660 = sshra.s32 %s659, 7
        %s661 = sand.u32 %s659, 127
        %s662 = sadd.s32 %s660, %s197
        %s663 = smul.u32 %s662, 256
        %s664 = sshra.s32 %s659, 7
        %s665 = sand.u32 %s659, 127
        %s666 = sadd.s32 %s204, %s665
        %s667 = sadd.s32 %s663, %s666
        %s668 = sld [smem:[#allocation10 + %s667]]
        %v669 = vld [vmem:[%s238] sm:$0xff]
        %v670 = vstv %s668
        %v671 = vsub.f32 %v669, %v670
        %v672 = vmul.f32 %v671, %v671
        %v673 = vadd.f32 %v658, %v672
        %v674 = vld [vmem:[#allocation2] sm:$0xff]
        %v675 = vmin.f32 %v674, %v673
        %676 = vst.msk [vmem:[#allocation2] sm:$0xff] %vm188, %v675
        %v677 = vsel %vm188, %v675, -inf
        %678 = vmax.xlane.f32.xlu0 %v677
        %v679 = vpop.xlane.xlu0 %678
        %v680 = vrot.slane %v679, 4
        %v681 = vmax.f32 %v679, %v680
        %v682 = vrot.slane %v681, 2
        %v683 = vmax.f32 %v681, %v682
        %v684 = vrot.slane %v683, 1
        %v685 = vmax.f32 %v683, %v684
        %s686 = vtos %v685
        %v687 = vstv %s686
        %vm688 = vcmp.eq.f32.partialorder %v675, %v687
        %v689 = vsel %vm688, %v185, 128
        %v690 = vsel %vm188, %v689, 2147483647
        %v691 = vand.u32 %v690, 65535
        %v692 = vshra.s32 %v690, 16
        %v693 = vcvt.s32.f32 %v691
        %v694 = vcvt.s32.f32 %v692
        %695 = vmin.xlane.f32.xlu0 %v694
        %v696 = vpop.xlane.xlu0 %695
        %vm697 = vcmp.eq.f32.partialorder %v694, %v696
        %v698 = vsel %vm697, %v693, inf
        %699 = vmin.xlane.f32.xlu0 %v698
        %v700 = vpop.xlane.xlu0 %699
        %v701 = vcvt.f32.s32 %v700
        %v702 = vcvt.f32.s32 %v696
        %v703 = vshll.u32 %v702, 16
        %v704 = vadd.s32 %v703, %v701
        %v705 = vrot.slane %v704, 4
        %vm706 = vcmp.lt.s32.totalorder %v704, %v705
        %v707 = vsel %vm706, %v704, %v705
        %v708 = vrot.slane %v707, 2
        %vm709 = vcmp.lt.s32.totalorder %v707, %v708
        %v710 = vsel %vm709, %v707, %v708
        %v711 = vrot.slane %v710, 1
        %vm712 = vcmp.lt.s32.totalorder %v710, %v711
        %v713 = vsel %vm712, %v710, %v711
        %s714 = vtos %v713
        %s715 = scalar_lea.smem [#allocation3], 6
        %716 = sst [smem:[%s715]] %s714
        %s717 = sshra.s32 %s714, 7
        %s718 = sand.u32 %s714, 127
        %s719 = sadd.s32 %s717, %s197
        %s720 = smul.u32 %s719, 256
        %s721 = sshra.s32 %s714, 7
        %s722 = sand.u32 %s714, 127
        %s723 = sadd.s32 %s204, %s722
        %s724 = sadd.s32 %s720, %s723
        %s725 = sld [smem:[#allocation10 + %s724]]
        %v726 = vld [vmem:[%s155] sm:$0xff]
        %v727 = vstv %s725
        %v728 = vsub.f32 %v726, %v727
        %v729 = vmul.f32 %v728, %v728
        %s730 = sadd.s32 %s714, 128
        %s731 = sshra.s32 %s730, 7
        %s732 = sand.u32 %s730, 127
        %s733 = sadd.s32 %s731, %s197
        %s734 = smul.u32 %s733, 256
        %s735 = sshra.s32 %s730, 7
        %s736 = sand.u32 %s730, 127
        %s737 = sadd.s32 %s204, %s736
        %s738 = sadd.s32 %s734, %s737
        %s739 = sld [smem:[#allocation10 + %s738]]
        %v740 = vld [vmem:[%s222] sm:$0xff]
        %v741 = vstv %s739
        %v742 = vsub.f32 %v740, %v741
        %v743 = vmul.f32 %v742, %v742
        %v744 = vadd.f32 %v729, %v743
        %s745 = sadd.s32 %s714, 256
        %s746 = sshra.s32 %s745, 7
        %s747 = sand.u32 %s745, 127
        %s748 = sadd.s32 %s746, %s197
        %s749 = smul.u32 %s748, 256
        %s750 = sshra.s32 %s745, 7
        %s751 = sand.u32 %s745, 127
        %s752 = sadd.s32 %s204, %s751
        %s753 = sadd.s32 %s749, %s752
        %s754 = sld [smem:[#allocation10 + %s753]]
        %v755 = vld [vmem:[%s238] sm:$0xff]
        %v756 = vstv %s754
        %v757 = vsub.f32 %v755, %v756
        %v758 = vmul.f32 %v757, %v757
        %v759 = vadd.f32 %v744, %v758
        %v760 = vld [vmem:[#allocation2] sm:$0xff]
        %v761 = vmin.f32 %v760, %v759
        %762 = vst.msk [vmem:[#allocation2] sm:$0xff] %vm188, %v761
        %v763 = vsel %vm188, %v761, -inf
        %764 = vmax.xlane.f32.xlu0 %v763
        %v765 = vpop.xlane.xlu0 %764
        %v766 = vrot.slane %v765, 4
        %v767 = vmax.f32 %v765, %v766
        %v768 = vrot.slane %v767, 2
        %v769 = vmax.f32 %v767, %v768
        %v770 = vrot.slane %v769, 1
        %v771 = vmax.f32 %v769, %v770
        %s772 = vtos %v771
        %v773 = vstv %s772
        %vm774 = vcmp.eq.f32.partialorder %v761, %v773
        %v775 = vsel %vm774, %v185, 128
        %v776 = vsel %vm188, %v775, 2147483647
        %v777 = vand.u32 %v776, 65535
        %v778 = vshra.s32 %v776, 16
        %v779 = vcvt.s32.f32 %v777
        %v780 = vcvt.s32.f32 %v778
        %781 = vmin.xlane.f32.xlu0 %v780
        %v782 = vpop.xlane.xlu0 %781
        %vm783 = vcmp.eq.f32.partialorder %v780, %v782
        %v784 = vsel %vm783, %v779, inf
        %785 = vmin.xlane.f32.xlu0 %v784
        %v786 = vpop.xlane.xlu0 %785
        %v787 = vcvt.f32.s32 %v786
        %v788 = vcvt.f32.s32 %v782
        %v789 = vshll.u32 %v788, 16
        %v790 = vadd.s32 %v789, %v787
        %v791 = vrot.slane %v790, 4
        %vm792 = vcmp.lt.s32.totalorder %v790, %v791
        %v793 = vsel %vm792, %v790, %v791
        %v794 = vrot.slane %v793, 2
        %vm795 = vcmp.lt.s32.totalorder %v793, %v794
        %v796 = vsel %vm795, %v793, %v794
        %v797 = vrot.slane %v796, 1
        %vm798 = vcmp.lt.s32.totalorder %v796, %v797
        %v799 = vsel %vm798, %v796, %v797
        %s800 = vtos %v799
        %s801 = scalar_lea.smem [#allocation3], 7
        %802 = sst [smem:[%s801]] %s800
        %s803 = sshra.s32 %s800, 7
        %s804 = sand.u32 %s800, 127
        %s805 = sadd.s32 %s803, %s197
        %s806 = smul.u32 %s805, 256
        %s807 = sshra.s32 %s800, 7
        %s808 = sand.u32 %s800, 127
        %s809 = sadd.s32 %s204, %s808
        %s810 = sadd.s32 %s806, %s809
        %s811 = sld [smem:[#allocation10 + %s810]]
        %v812 = vld [vmem:[%s155] sm:$0xff]
        %v813 = vstv %s811
        %v814 = vsub.f32 %v812, %v813
        %v815 = vmul.f32 %v814, %v814
        %s816 = sadd.s32 %s800, 128
        %s817 = sshra.s32 %s816, 7
        %s818 = sand.u32 %s816, 127
        %s819 = sadd.s32 %s817, %s197
        %s820 = smul.u32 %s819, 256
        %s821 = sshra.s32 %s816, 7
        %s822 = sand.u32 %s816, 127
        %s823 = sadd.s32 %s204, %s822
        %s824 = sadd.s32 %s820, %s823
        %s825 = sld [smem:[#allocation10 + %s824]]
        %v826 = vld [vmem:[%s222] sm:$0xff]
        %v827 = vstv %s825
        %v828 = vsub.f32 %v826, %v827
        %v829 = vmul.f32 %v828, %v828
        %v830 = vadd.f32 %v815, %v829
        %s831 = sadd.s32 %s800, 256
        %s832 = sshra.s32 %s831, 7
        %s833 = sand.u32 %s831, 127
        %s834 = sadd.s32 %s832, %s197
        %s835 = smul.u32 %s834, 256
        %s836 = sshra.s32 %s831, 7
        %s837 = sand.u32 %s831, 127
        %s838 = sadd.s32 %s204, %s837
        %s839 = sadd.s32 %s835, %s838
        %s840 = sld [smem:[#allocation10 + %s839]]
        %v841 = vld [vmem:[%s238] sm:$0xff]
        %v842 = vstv %s840
        %v843 = vsub.f32 %v841, %v842
        %v844 = vmul.f32 %v843, %v843
        %v845 = vadd.f32 %v830, %v844
        %v846 = vld [vmem:[#allocation2] sm:$0xff]
        %v847 = vmin.f32 %v846, %v845
        %848 = vst.msk [vmem:[#allocation2] sm:$0xff] %vm188, %v847
        %vm849 = vcmp.eq.s32.totalorder %v184, 0
        %s850 = sld [smem:[#allocation3]]
        %v851 = vstv %s850
        %v852 = vsel %vm849, %v851, 0
        %vm853 = vcmp.eq.s32.totalorder %v184, 1
        %s854 = sld [smem:[#allocation3 + $0x1]]
        %v855 = vstv %s854
        %v856 = vsel %vm853, %v855, %v852
        %vm857 = vcmp.eq.s32.totalorder %v184, 2
        %s858 = sld [smem:[#allocation3 + $0x2]]
        %v859 = vstv %s858
        %v860 = vsel %vm857, %v859, %v856
        %vm861 = vcmp.eq.s32.totalorder %v184, 3
        %s862 = sld [smem:[#allocation3 + $0x3]]
        %v863 = vstv %s862
        %v864 = vsel %vm861, %v863, %v860
        %vm865 = vcmp.eq.s32.totalorder %v184, 4
        %s866 = sld [smem:[#allocation3 + $0x4]]
        %v867 = vstv %s866
        %v868 = vsel %vm865, %v867, %v864
        %vm869 = vcmp.eq.s32.totalorder %v184, 5
        %s870 = sld [smem:[#allocation3 + $0x5]]
        %v871 = vstv %s870
        %v872 = vsel %vm869, %v871, %v868
        %vm873 = vcmp.eq.s32.totalorder %v184, 6
        %s874 = sld [smem:[#allocation3 + $0x6]]
        %v875 = vstv %s874
        %v876 = vsel %vm873, %v875, %v872
        %vm877 = vcmp.eq.s32.totalorder %v184, 7
        %s878 = sld [smem:[#allocation3 + $0x7]]
        %v879 = vstv %s878
        %v880 = vsel %vm877, %v879, %v876
        %881 = vst [vmem:[%s179] sm:$0x1] %v880
        %s882 = sand.u32 %s80, 1
        %s883 = scalar_lea.sflag [#allocation8], %s882
        %s884 = sand.u32 %s80, 1
        %s885 = scalar_lea.vmem [#allocation11], %s884
        // Predicated region
        $region37: #{tpu_custom_call.1} parent=27 // pred_check
          %p886 = pneg %p90
        $region38: #{tpu_custom_call.1} parent=27 // pred_check_branch
          %888 = sbr.rel (%p886) target = $region40
        $region39: #{tpu_custom_call.1} parent=27 // pred_region
          %s890 = ssub.s32 16, 16
          %891 = vsyncadd %s883, %s890
          %s892 = smul.addr %s25, 16
          %s893 = scalar_lea.hbm %s3, %s892
          %s895 = sshll.u32 %s885, 4
          %s896 = int_to_ptr.vmem [resolvable:$true] %s895
          %898 = dma.vmem_to_hbm [thread:$0]  %s896, 16, %s893, %s883
        $region40: #{tpu_custom_call.1} parent=27 // pred_fallthru
          _
      $region28: #{tpu_custom_call.1} parent=5 // pred_fallthru
        _
      %p899 = scmp.le.s32.totalorder 2, %s20
      // Predicated region
      $region41: #{tpu_custom_call.1} parent=5 // pred_check
        %p900 = pneg %p899
      $region42: #{tpu_custom_call.1} parent=5 // pred_check_branch
        %902 = sbr.rel (%p900) target = $region44
      $region43: #{tpu_custom_call.1} parent=5 // pred_region
        %s903 = ssub.s32 %s20, 2
        // Predicated region
        $region45: #{tpu_custom_call.1} parent=43 // pred_check
          %p904 = pneg %p96
        $region46: #{tpu_custom_call.1} parent=43 // pred_check_branch
          %906 = sbr.rel (%p904) target = $region48
        $region47: #{tpu_custom_call.1} parent=43 // pred_region
          %s907 = sand.u32 %s81, 1
          %s908 = scalar_lea.sflag [#allocation8], %s907
          %s909 = sand.u32 %s81, 1
          %s910 = scalar_lea.vmem [#allocation11], %s909
          %911 = dma.done %s908, 16
        $region48: #{tpu_custom_call.1} parent=43 // pred_fallthru
          _
      $region44: #{tpu_custom_call.1} parent=5 // pred_fallthru
        _
    $region6: #{tpu_custom_call.1} parent=1 // loop_footer
      %s24 = sadd.s32 1, %s20
    $region7: #{tpu_custom_call.1} parent=1 // loop_footer_branch
      %19 = sbr.rel target = $region3
    $region8: #{tpu_custom_call.1} parent=1 // loop_exit
      _
    %912 = vsyncpa [#allocation7], 1
    %s913 = scalar_lea.sflag [#allocation7], 1
    %914 = vsyncpa %s913, 1
    %915 = vsyncpa [#allocation8], 1
    %s916 = scalar_lea.sflag [#allocation8], 1
    %917 = vsyncpa %s916, 1
    %918 = vsyncpa [#allocation9], 1
    %s919 = scalar_lea.sflag [#allocation9], 1
    %920 = vsyncpa %s919, 1

</llo_original>
